<compile_context>
chip_gen: v7x
topology: tpu7x:2x2x1
jax: 0.10.0
libtpu: 0.0.40
codegen_flags: <defaults>
</compile_context>

<pallas_src>
import functools

import jax
import jax.numpy as jnp
from jax import lax
from jax.experimental import pallas as pl
from jax.experimental.pallas import tpu as pltpu


def _round_up(x, m):
    return ((x + m - 1) // m) * m


def _cdiv(a, b):
    return (a + b - 1) // b


# ----------------------------- Pallas kernel --------------------------------
def _moe_glu_kernel(flags_ref, fetch_ref,            # SMEM scalar-prefetch (1-D)
                    x_ref, w_ref, wgu_ref, w2_ref, bgu_ref, b2_ref,
                    o_ref, acc_ref, *, E):
    i = pl.program_id(0)        # token tile
    e = pl.program_id(1)        # expert (reduction axis)
    c = pl.program_id(2)        # hidden chunk (reduction axis)

    # accumulator is resident across (expert, chunk) -> init at the first step
    # (must stay OUTSIDE the expert-skip guard)
    @pl.when(jnp.logical_and(e == 0, c == 0))
    def _init():
        acc_ref[...] = jnp.zeros_like(acc_ref)

    # skip experts no token in this tile is routed to (compute only; the
    # weight DMA is skipped via the fetch-index index_maps in the BlockSpecs)
    @pl.when(flags_ref[i * E + e] != 0)
    def _compute():
        x = x_ref[...]                                              # bf16 [tm, in_pad]
        # fused gate|up chunk: one wide MXU pass, f32 accumulate
        gu = jnp.dot(x, wgu_ref[...],
                     preferred_element_type=jnp.float32) + bgu_ref[...]   # [tm, 2*th]
        th = wgu_ref.shape[-1] // 2                                 # static, mult of 128
        gate = gu[:, :th]
        up = gu[:, th:]
        h = (gate * jax.nn.sigmoid(gate)) * up                      # silu(gate)*up, f32
        out = jnp.dot(h.astype(w2_ref.dtype), w2_ref[...],
                      preferred_element_type=jnp.float32)           # [tm, out_pad]
        w = w_ref[...]                                              # [tm, 1] f32

        @pl.when(c == 0)
        def _bias():                                                # + w * b2 once/expert
            acc_ref[...] += w * b2_ref[...]

        acc_ref[...] += w * out

    # single lane-dense store per token tile, with dtype cast
    @pl.when(jnp.logical_and(e == pl.num_programs(1) - 1,
                             c == pl.num_programs(2) - 1))
    def _store():
        o_ref[...] = acc_ref[...].astype(o_ref.dtype)


# ------------------------------ tiling policy --------------------------------
def _device_params():
    kind = ""
    try:
        kind = jax.devices()[0].device_kind.lower()
    except Exception:
        pass
    if "v7" in kind:
        return {"tm": 512, "vmem_cap": 56 << 20, "is_v7x": True}     # 64 MiB physical
    if "v6" in kind:
        return {"tm": 1024, "vmem_cap": 100 << 20, "is_v7x": False}  # 128 MiB physical
    if "v5" in kind:
        return {"tm": 256, "vmem_cap": 100 << 20, "is_v7x": False}
    return {"tm": 512, "vmem_cap": 48 << 20, "is_v7x": False}        # conservative


def _vmem_bytes(tm, in_pad, th, out_pad, out_itemsize):
    wgu = in_pad * (2 * th) * 2          # bf16 block
    w2 = th * out_pad * 2
    bgu = (2 * th) * 4
    b2 = out_pad * 4
    xb = tm * in_pad * 2
    wc = tm * 4
    ob = tm * out_pad * out_itemsize
    acc = tm * out_pad * 4
    inter = tm * (2 * th) * 4 + tm * th * 4 + tm * th * 2   # gu, h (f32), h (bf16)
    return 2 * (wgu + w2 + bgu + b2 + xb + wc) + 2 * ob + acc + inter


def plan_tiling(N, in_dim, hidden, out_dim, out_itemsize):
    dev = _device_params()
    in_pad = _round_up(max(in_dim, 1), 128)
    out_pad = _round_up(max(out_dim, 1), 128)
    hp0 = _round_up(max(hidden, 1), 128)

    # roofline-sized token tile (arith intensity ~ tm FLOPs / weight byte);
    # pad N to a multiple of tm instead of shrinking the tile.
    tm = min(dev["tm"], _round_up(N, 256))
    if dev["is_v7x"] and _cdiv(N, tm) == 1 and tm >= 512:
        tm //= 2                                   # give both TensorCores work
    np_ = _round_up(N, tm)
    tiles = np_ // tm
    if dev["is_v7x"] and tiles > 1 and tiles % 2 == 1:
        np_ += tm                                  # even tile count for megacore
        tiles += 1

    # hidden-chunking so double-buffered weight blocks + intermediates fit VMEM
    budget = int(dev["vmem_cap"] * 0.8)
    th = hp0
    while _vmem_bytes(tm, in_pad, th, out_pad, out_itemsize) > budget and th > 128:
        th = _round_up(_cdiv(th, 2), 128)
    while _vmem_bytes(tm, in_pad, th, out_pad, out_itemsize) > budget and tm > 256:
        tm //= 2
        np_ = _round_up(N, tm)
        tiles = np_ // tm
    hc = _cdiv(hp0, th)

    est = _vmem_bytes(tm, in_pad, th, out_pad, out_itemsize)
    vmem_limit = int(min(dev["vmem_cap"], max(32 << 20, int(est * 1.3))))
    return {"tm": tm, "np": np_, "tiles": tiles, "in_pad": in_pad,
            "out_pad": out_pad, "th": th, "hc": hc, "vmem_limit": vmem_limit}


# ------------------------------ weight prep ----------------------------------
def prepare_expert_weights(Wg, W1, W2, bg, b1, b2, plan):
    """Fuse gate+up (chunk-interleaved), pad dims, cast matmul weights to bf16."""
    E, in_dim, hidden = Wg.shape
    in_pad, th, hc, out_pad = plan["in_pad"], plan["th"], plan["hc"], plan["out_pad"]
    hp = th * hc

    def pad3(a, d1, d2):
        return jnp.pad(a, ((0, 0), (0, d1 - a.shape[1]), (0, d2 - a.shape[2])))

    Wg_p = pad3(Wg, in_pad, hp)
    W1_p = pad3(W1, in_pad, hp)
    bg_p = pad3(bg, 1, hp)
    b1_p = pad3(b1, 1, hp)
    W2_p = pad3(W2, hp, out_pad)
    b2_p = pad3(b2, 1, out_pad)

    # chunk-interleaved fused layout: chunk c of the last dim = [gate_c | up_c]
    Wgu = jnp.stack([Wg_p.reshape(E, in_pad, hc, th),
                     W1_p.reshape(E, in_pad, hc, th)],
                    axis=3).reshape(E, in_pad, hc * 2 * th).astype(jnp.bfloat16)
    bgu = jnp.stack([bg_p.reshape(E, 1, hc, th),
                     b1_p.reshape(E, 1, hc, th)],
                    axis=3).reshape(E, 1, hc * 2 * th).astype(jnp.float32)
    return Wgu, W2_p.astype(jnp.bfloat16), bgu, b2_p.astype(jnp.float32)


# ------------------------------- gating --------------------------------------
def gating_dense_weights(x, centroid, k):
    """torch gating: cdist (p=2) -> topk (LARGEST, torch default) -> softmax of
    the raw distances.  Returns dense [N, E] routing weights (0 if unselected)."""
    E = centroid.shape[0]
    x2d = x.reshape(-1, x.shape[-1]).astype(jnp.float32)
    c = centroid.astype(jnp.float32)
    xn = jnp.sum(x2d * x2d, axis=-1, keepdims=True)
    cn = jnp.sum(c * c, axis=-1)[None, :]
    sq = jnp.maximum(xn + cn - 2.0 * (x2d @ c.T), 0.0)
    cdist = jnp.sqrt(sq)                                       # [N, E]
    # TODO(synk): lax.top_k tie-breaking on exactly-equal distances may differ
    # from torch.topk (different expert picked on exact ties).
    topw, topi = lax.top_k(cdist, k)
    w = jax.nn.softmax(topw, axis=1)
    onehot = jax.nn.one_hot(topi, E, dtype=w.dtype)            # [N, k, E]
    return jnp.sum(onehot * w[:, :, None], axis=1).astype(jnp.float32)   # [N, E]


# ------------------------------ pallas_call ----------------------------------
def moe_ffn_pallas(x2d, dense_w, Wgu, W2p, bgu, b2f, plan):
    N = x2d.shape[0]
    E = Wgu.shape[0]
    tm, np_, tiles = plan["tm"], plan["np"], plan["tiles"]
    in_pad, out_pad, th, hc = plan["in_pad"], plan["out_pad"], plan["th"], plan["hc"]
    two_th = 2 * th

    # pad tokens / features (padded rows have zero routing weight -> no effect)
    x_pad = jnp.zeros((np_, in_pad), jnp.bfloat16).at[:N, :x2d.shape[1]].set(
        x2d.astype(jnp.bfloat16))
    dw = jnp.zeros((np_, E), jnp.float32).at[:N].set(dense_w)

    # per-(tile, expert) active flags (1-D SMEM) + DMA-skip "fetch index"
    # (carry-forward of the last active expert so skipped steps re-use the
    #  resident weight block -> no new weight DMA for inactive experts)
    active = jnp.any(dw.reshape(tiles, tm, E) != 0.0, axis=1)          # [tiles, E]
    act_idx = jnp.where(active, jnp.arange(E, dtype=jnp.int32)[None, :], -1)
    ffill = lax.cummax(act_idx, axis=1)
    first = jnp.argmax(active, axis=1).astype(jnp.int32)
    fetch = jnp.where(ffill >= 0, ffill, first[:, None]).astype(jnp.int32).reshape(-1)
    flags = active.astype(jnp.int32).reshape(-1)

    w_cols = jnp.transpose(dw).reshape(E, np_, 1)                      # [E, Np, 1]

    def wgu_map(i, e, c, flags_r, fetch_r):        # also used for bgu
        idx = i * E + e
        f = flags_r[idx]
        c_eff = c * f + (hc - 1) * (1 - f)         # pin chunk when inactive -> no DMA
        return (fetch_r[idx], 0, c_eff)

    def w2_map(i, e, c, flags_r, fetch_r):
        idx = i * E + e
        f = flags_r[idx]
        c_eff = c * f + (hc - 1) * (1 - f)
        return (fetch_r[idx], c_eff, 0)

    def b2_map(i, e, c, flags_r, fetch_r):
        return (fetch_r[i * E + e], 0, 0)

    def wcol_map(i, e, c, flags_r, fetch_r):
        return (fetch_r[i * E + e], i, 0)

    out = pl.pallas_call(
        functools.partial(_moe_glu_kernel, E=E),
        out_shape=jax.ShapeDtypeStruct((np_, out_pad), x2d.dtype),
        grid_spec=pltpu.PrefetchScalarGridSpec(
            num_scalar_prefetch=2,
            grid=(tiles, E, hc),
            in_specs=[
                pl.BlockSpec((tm, in_pad), lambda i, e, c, fl, ft: (i, 0)),   # x tokens
                pl.BlockSpec((None, tm, 1), wcol_map),                        # routing col
                pl.BlockSpec((None, in_pad, two_th), wgu_map),                # Wg|W1 chunk
                pl.BlockSpec((None, th, out_pad), w2_map),                    # W2 chunk
                pl.BlockSpec((None, 1, two_th), wgu_map),                     # bg|b1 chunk
                pl.BlockSpec((None, 1, out_pad), b2_map),                     # b2
            ],
            out_specs=pl.BlockSpec((tm, out_pad), lambda i, e, c, fl, ft: (i, 0)),
            scratch_shapes=[pltpu.VMEM((tm, out_pad), jnp.float32)],          # f32 acc
        ),
        compiler_params=pltpu.CompilerParams(
            dimension_semantics=("parallel", "arbitrary", "arbitrary"),
            vmem_limit_bytes=plan["vmem_limit"]),
    )(flags, fetch, x_pad, w_cols, Wgu, W2p, bgu, b2f)
    return out


# ------------------------------ top-level ------------------------------------
def moe_feedforward(x, centroid, Wg, W1, W2, bg, b1, b2, k):
    in_dim = x.shape[-1]
    hidden = Wg.shape[-1]
    out_dim = W2.shape[-1]
    x2d = x.reshape(-1, in_dim)
    N = x2d.shape[0]

    dense_w = gating_dense_weights(x, centroid, k)
    plan = plan_tiling(N, in_dim, hidden, out_dim, jnp.dtype(x.dtype).itemsize)
    Wgu, W2p, bgu, b2f = prepare_expert_weights(Wg, W1, W2, bg, b1, b2, plan)
    out_pad2d = moe_ffn_pallas(x2d, dense_w, Wgu, W2p, bgu, b2f, plan)
    return out_pad2d[:N, :out_dim].reshape(x.shape[:-1] + (out_dim,))


def moe_feedforward_ref(x, centroid, Wg, W1, W2, bg, b1, b2, k):
    """Pure-JAX f32 reference (dense equivalent of the torch expert loop)."""
    dense_w = gating_dense_weights(x, centroid, k)               # [N, E]
    x2d = x.reshape(-1, x.shape[-1]).astype(jnp.float32)
    gate = jnp.einsum('nd,edh->enh', x2d, Wg) + bg
    up = jnp.einsum('nd,edh->enh', x2d, W1) + b1
    h = jax.nn.silu(gate) * up
    out = jnp.einsum('enh,eho->eno', h, W2) + b2                 # [E, N, out]
    res = jnp.sum(jnp.transpose(dense_w)[:, :, None] * out, axis=0)
    return res.reshape(x.shape[:-1] + (W2.shape[-1],)).astype(x.dtype)


# -------------------------------- main ---------------------------------------
if __name__ == "__main__":
    key = jax.random.PRNGKey(0)
    B, S, in_dim = 2, 8, 32          # x: [2, 8, 32]
    E, K = 4, 2                      # num_experts, num_experts_per_token
    # GatedLinearUnitFeedForward.adjust_hidden_dim(4 * in_dim)
    hidden = (int(4 * in_dim * 2 / 3) + 7) // 8 * 8
    out_dim = in_dim                 # module default: out_dim = in_dim

    ks = jax.random.split(key, 9)
    x = jax.random.normal(ks[0], (B, S, in_dim), jnp.float32)
    centroid = jax.random.normal(ks[1], (E, in_dim), jnp.float32)

    s_in = 1.0 / jnp.sqrt(in_dim)
    s_h = 1.0 / jnp.sqrt(hidden)
    Wg = jax.random.normal(ks[2], (E, in_dim, hidden), jnp.float32) * s_in
    W1 = jax.random.normal(ks[3], (E, in_dim, hidden), jnp.float32) * s_in
    W2 = jax.random.normal(ks[4], (E, hidden, out_dim), jnp.float32) * s_h
    bg = jax.random.normal(ks[5], (E, 1, hidden), jnp.float32) * 0.02
    b1 = jax.random.normal(ks[6], (E, 1, hidden), jnp.float32) * 0.02
    b2 = jax.random.normal(ks[7], (E, 1, out_dim), jnp.float32) * 0.02

    out = jax.block_until_ready(moe_feedforward(x, centroid, Wg, W1, W2, bg, b1, b2, K))
    ref = jax.block_until_ready(moe_feedforward_ref(x, centroid, Wg, W1, W2, bg, b1, b2, K))

    assert out.shape == x.shape[:-1] + (out_dim,)
    # kernel matmuls run in bf16 (f32 accumulation) -> loosened tolerance vs f32 ref
    assert jnp.allclose(out, ref, atol=5e-2, rtol=5e-2), "mismatch vs reference"
    print("KERNEL_OK")
</pallas_src>

<mosaic_0001>
module attributes {stable_mosaic.version = 11 : i64} {
  func.func @_moe_glu_kernel(%arg0: i32, %arg1: i32, %arg2: i32, %arg3: memref<4xi32, #tpu.memory_space<smem>>, %arg4: memref<4xi32, #tpu.memory_space<smem>>, %arg5: memref<256x128xbf16, #tpu.memory_space<vmem>>, %arg6: memref<1x256x1xf32, #tpu.memory_space<vmem>>, %arg7: memref<1x128x256xbf16, #tpu.memory_space<vmem>>, %arg8: memref<1x128x128xbf16, #tpu.memory_space<vmem>>, %arg9: memref<1x1x256xf32, #tpu.memory_space<vmem>>, %arg10: memref<1x1x128xf32, #tpu.memory_space<vmem>>, %arg11: memref<256x128xf32, #tpu.memory_space<vmem>>, %arg12: memref<256x128xf32, #tpu.memory_space<vmem>>) attributes {dimension_semantics = [#tpu.dimension_semantics<parallel>, #tpu.dimension_semantics<arbitrary>, #tpu.dimension_semantics<arbitrary>], iteration_bounds = array<i64: 1, 4, 1>, scalar_prefetch = 2 : i64, scratch_operands = 1 : i64, tpu.core_type = #tpu.core_type<tc>, window_params = [{transform_indices = @transform_0, window_bounds = array<i64: 256, 128>}, {transform_indices = @transform_1, window_bounds = array<i64: 1, 256, 1>}, {transform_indices = @transform_2, window_bounds = array<i64: 1, 128, 256>}, {transform_indices = @transform_3, window_bounds = array<i64: 1, 128, 128>}, {transform_indices = @transform_4, window_bounds = array<i64: 1, 1, 256>}, {transform_indices = @transform_5, window_bounds = array<i64: 1, 1, 128>}, {transform_indices = @transform_6, window_bounds = array<i64: 256, 128>}]} {
    %c0_i32 = arith.constant 0 : i32
    %0 = arith.cmpi eq, %arg1, %c0_i32 : i32
    %c0_i32_0 = arith.constant 0 : i32
    %1 = arith.cmpi eq, %arg2, %c0_i32_0 : i32
    %2 = arith.andi %0, %1 : i1
    %3 = arith.extui %2 : i1 to i32
    %c0_i32_1 = arith.constant 0 : i32
    %4 = arith.cmpi ne, %3, %c0_i32_1 : i32
    scf.if %4 {
      %cst = arith.constant 0.000000e+00 : f32
      %17 = vector.broadcast %cst : f32 to vector<256x128xf32>
      %c0 = arith.constant 0 : index
      %c0_6 = arith.constant 0 : index
      %18 = vector.load %arg12[%c0, %c0_6] : memref<256x128xf32, #tpu.memory_space<vmem>>, vector<256x128xf32>
      tpu.vector_store %arg12[%c0, %c0_6], %17 {strides = array<i32>} : memref<256x128xf32, #tpu.memory_space<vmem>>, vector<256x128xf32>,
    } else {
    }
    %c4_i32 = arith.constant 4 : i32
    %5 = arith.muli %arg0, %c4_i32 : i32
    %6 = arith.addi %5, %arg1 : i32
    %7 = arith.index_cast %6 : i32 to index
    %8 = memref.load %arg3[%7] : memref<4xi32, #tpu.memory_space<smem>>
    %c0_i32_2 = arith.constant 0 : i32
    %9 = arith.cmpi ne, %8, %c0_i32_2 : i32
    %10 = arith.extui %9 : i1 to i32
    %c0_i32_3 = arith.constant 0 : i32
    %11 = arith.cmpi ne, %10, %c0_i32_3 : i32
    scf.if %11 {
      %c0 = arith.constant 0 : index
      %c0_6 = arith.constant 0 : index
      %17 = vector.load %arg5[%c0, %c0_6] : memref<256x128xbf16, #tpu.memory_space<vmem>>, vector<256x128xbf16>
      %c0_7 = arith.constant 0 : index
      %c0_8 = arith.constant 0 : index
      %c0_9 = arith.constant 0 : index
      %18 = vector.load %arg7[%c0_7, %c0_8, %c0_9] : memref<1x128x256xbf16, #tpu.memory_space<vmem>>, vector<1x128x256xbf16>
      %19 = vector.shape_cast %18 : vector<1x128x256xbf16> to vector<128x256xbf16>
      %cst = arith.constant dense<0.000000e+00> : vector<256x256xf32>
      %20 = tpu.matmul %17, %19, %cst {dimension_numbers = #tpu.dot_dimension_numbers<[1], [0], [0], [1], [0, 0, 1, 1], [], []>} : vector<256x128xbf16>, vector<128x256xbf16>, vector<256x256xf32> -> vector<256x256xf32>
      %c0_10 = arith.constant 0 : index
      %c0_11 = arith.constant 0 : index
      %c0_12 = arith.constant 0 : index
      %21 = vector.load %arg9[%c0_10, %c0_11, %c0_12] : memref<1x1x256xf32, #tpu.memory_space<vmem>>, vector<1x1x256xf32>
      %22 = vector.shape_cast %21 : vector<1x1x256xf32> to vector<1x256xf32>
      %23 = vector.broadcast %22 : vector<1x256xf32> to vector<256x256xf32>
      %24 = arith.addf %20, %23 : vector<256x256xf32>
      %25 = vector.extract_strided_slice %24 {offsets = [0, 0], sizes = [256, 128], strides = [1, 1]} : vector<256x256xf32> to vector<256x128xf32>
      %26 = vector.extract_strided_slice %24 {offsets = [0, 128], sizes = [256, 128], strides = [1, 1]} : vector<256x256xf32> to vector<256x128xf32>
      %27 = arith.negf %25 : vector<256x128xf32>
      %28 = math.exp %27 : vector<256x128xf32>
      %cst_13 = arith.constant 1.000000e+00 : f32
      %29 = vector.broadcast %cst_13 : f32 to vector<256x128xf32>
      %30 = arith.addf %29, %28 : vector<256x128xf32>
      %31 = arith.divf %29, %30 : vector<256x128xf32>
      %32 = arith.mulf %25, %31 : vector<256x128xf32>
      %33 = arith.mulf %32, %26 : vector<256x128xf32>
      %34 = arith.truncf %33 : vector<256x128xf32> to vector<256x128xbf16>
      %c0_14 = arith.constant 0 : index
      %c0_15 = arith.constant 0 : index
      %c0_16 = arith.constant 0 : index
      %35 = vector.load %arg8[%c0_14, %c0_15, %c0_16] : memref<1x128x128xbf16, #tpu.memory_space<vmem>>, vector<1x128x128xbf16>
      %36 = vector.shape_cast %35 : vector<1x128x128xbf16> to vector<128x128xbf16>
      %cst_17 = arith.constant dense<0.000000e+00> : vector<256x128xf32>
      %37 = tpu.matmul %34, %36, %cst_17 {dimension_numbers = #tpu.dot_dimension_numbers<[1], [0], [0], [1], [0, 0, 1, 1], [], []>} : vector<256x128xbf16>, vector<128x128xbf16>, vector<256x128xf32> -> vector<256x128xf32>
      %c0_18 = arith.constant 0 : index
      %c0_19 = arith.constant 0 : index
      %c0_20 = arith.constant 0 : index
      %38 = vector.load %arg6[%c0_18, %c0_19, %c0_20] : memref<1x256x1xf32, #tpu.memory_space<vmem>>, vector<1x256x1xf32>
      %39 = vector.shape_cast %38 : vector<1x256x1xf32> to vector<256x1xf32>
      %c0_i32_21 = arith.constant 0 : i32
      %40 = arith.cmpi eq, %arg2, %c0_i32_21 : i32
      %41 = arith.extui %40 : i1 to i32
      %c0_i32_22 = arith.constant 0 : i32
      %42 = arith.cmpi ne, %41, %c0_i32_22 : i32
      scf.if %42 {
        %c0_27 = arith.constant 0 : index
        %c0_28 = arith.constant 0 : index
        %48 = vector.load %arg12[%c0_27, %c0_28] : memref<256x128xf32, #tpu.memory_space<vmem>>, vector<256x128xf32>
        %c0_29 = arith.constant 0 : index
        %c0_30 = arith.constant 0 : index
        %c0_31 = arith.constant 0 : index
        %49 = vector.load %arg10[%c0_29, %c0_30, %c0_31] : memref<1x1x128xf32, #tpu.memory_space<vmem>>, vector<1x1x128xf32>
        %50 = vector.shape_cast %49 : vector<1x1x128xf32> to vector<1x128xf32>
        %51 = vector.broadcast %39 : vector<256x1xf32> to vector<256x128xf32>
        %52 = vector.broadcast %50 : vector<1x128xf32> to vector<256x128xf32>
        %53 = arith.mulf %51, %52 : vector<256x128xf32>
        %54 = arith.addf %48, %53 : vector<256x128xf32>
        %c0_32 = arith.constant 0 : index
        %c0_33 = arith.constant 0 : index
        %55 = vector.load %arg12[%c0_32, %c0_33] : memref<256x128xf32, #tpu.memory_space<vmem>>, vector<256x128xf32>
        tpu.vector_store %arg12[%c0_32, %c0_33], %54 {strides = array<i32>} : memref<256x128xf32, #tpu.memory_space<vmem>>, vector<256x128xf32>,
      } else {
      }
      %c0_23 = arith.constant 0 : index
      %c0_24 = arith.constant 0 : index
      %43 = vector.load %arg12[%c0_23, %c0_24] : memref<256x128xf32, #tpu.memory_space<vmem>>, vector<256x128xf32>
      %44 = vector.broadcast %39 : vector<256x1xf32> to vector<256x128xf32>
      %45 = arith.mulf %44, %37 : vector<256x128xf32>
      %46 = arith.addf %43, %45 : vector<256x128xf32>
      %c0_25 = arith.constant 0 : index
      %c0_26 = arith.constant 0 : index
      %47 = vector.load %arg12[%c0_25, %c0_26] : memref<256x128xf32, #tpu.memory_space<vmem>>, vector<256x128xf32>
      tpu.vector_store %arg12[%c0_25, %c0_26], %46 {strides = array<i32>} : memref<256x128xf32, #tpu.memory_space<vmem>>, vector<256x128xf32>,
    } else {
    }
    %c3_i32 = arith.constant 3 : i32
    %12 = arith.cmpi eq, %arg1, %c3_i32 : i32
    %c0_i32_4 = arith.constant 0 : i32
    %13 = arith.cmpi eq, %arg2, %c0_i32_4 : i32
    %14 = arith.andi %12, %13 : i1
    %15 = arith.extui %14 : i1 to i32
    %c0_i32_5 = arith.constant 0 : i32
    %16 = arith.cmpi ne, %15, %c0_i32_5 : i32
    scf.if %16 {
      %c0 = arith.constant 0 : index
      %c0_6 = arith.constant 0 : index
      %17 = vector.load %arg12[%c0, %c0_6] : memref<256x128xf32, #tpu.memory_space<vmem>>, vector<256x128xf32>
      %c0_7 = arith.constant 0 : index
      %c0_8 = arith.constant 0 : index
      %18 = vector.load %arg11[%c0_7, %c0_8] : memref<256x128xf32, #tpu.memory_space<vmem>>, vector<256x128xf32>
      tpu.vector_store %arg11[%c0_7, %c0_8], %17 {strides = array<i32>} : memref<256x128xf32, #tpu.memory_space<vmem>>, vector<256x128xf32>,
    } else {
    }
    return
  }
  func.func @transform_0(%arg0: i32, %arg1: i32, %arg2: i32, %arg3: memref<4xi32, #tpu.memory_space<smem>>, %arg4: memref<4xi32, #tpu.memory_space<smem>>) -> (i32, i32) {
    %c0_i32 = arith.constant 0 : i32
    %c0_i32_0 = arith.constant 0 : i32
    return %arg0, %c0_i32 : i32, i32
  }
  func.func @transform_1(%arg0: i32, %arg1: i32, %arg2: i32, %arg3: memref<4xi32, #tpu.memory_space<smem>>, %arg4: memref<4xi32, #tpu.memory_space<smem>>) -> (i32, i32, i32) {
    %c4_i32 = arith.constant 4 : i32
    %0 = arith.muli %arg0, %c4_i32 : i32
    %1 = arith.addi %0, %arg1 : i32
    %2 = arith.index_cast %1 : i32 to index
    %3 = memref.load %arg4[%2] : memref<4xi32, #tpu.memory_space<smem>>
    %c0_i32 = arith.constant 0 : i32
    %c0_i32_0 = arith.constant 0 : i32
    return %3, %arg0, %c0_i32 : i32, i32, i32
  }
  func.func @transform_2(%arg0: i32, %arg1: i32, %arg2: i32, %arg3: memref<4xi32, #tpu.memory_space<smem>>, %arg4: memref<4xi32, #tpu.memory_space<smem>>) -> (i32, i32, i32) {
    %c4_i32 = arith.constant 4 : i32
    %0 = arith.muli %arg0, %c4_i32 : i32
    %1 = arith.addi %0, %arg1 : i32
    %2 = arith.index_cast %1 : i32 to index
    %3 = memref.load %arg3[%2] : memref<4xi32, #tpu.memory_space<smem>>
    %4 = arith.muli %arg2, %3 : i32
    %c1_i32 = arith.constant 1 : i32
    %5 = arith.subi %c1_i32, %3 : i32
    %c0_i32 = arith.constant 0 : i32
    %6 = arith.muli %c0_i32, %5 : i32
    %7 = arith.addi %4, %6 : i32
    %8 = arith.index_cast %1 : i32 to index
    %9 = memref.load %arg4[%8] : memref<4xi32, #tpu.memory_space<smem>>
    %c0_i32_0 = arith.constant 0 : i32
    %c0_i32_1 = arith.constant 0 : i32
    return %9, %c0_i32_0, %7 : i32, i32, i32
  }
  func.func @transform_3(%arg0: i32, %arg1: i32, %arg2: i32, %arg3: memref<4xi32, #tpu.memory_space<smem>>, %arg4: memref<4xi32, #tpu.memory_space<smem>>) -> (i32, i32, i32) {
    %c4_i32 = arith.constant 4 : i32
    %0 = arith.muli %arg0, %c4_i32 : i32
    %1 = arith.addi %0, %arg1 : i32
    %2 = arith.index_cast %1 : i32 to index
    %3 = memref.load %arg3[%2] : memref<4xi32, #tpu.memory_space<smem>>
    %4 = arith.muli %arg2, %3 : i32
    %c1_i32 = arith.constant 1 : i32
    %5 = arith.subi %c1_i32, %3 : i32
    %c0_i32 = arith.constant 0 : i32
    %6 = arith.muli %c0_i32, %5 : i32
    %7 = arith.addi %4, %6 : i32
    %8 = arith.index_cast %1 : i32 to index
    %9 = memref.load %arg4[%8] : memref<4xi32, #tpu.memory_space<smem>>
    %c0_i32_0 = arith.constant 0 : i32
    %c0_i32_1 = arith.constant 0 : i32
    return %9, %7, %c0_i32_0 : i32, i32, i32
  }
  func.func @transform_4(%arg0: i32, %arg1: i32, %arg2: i32, %arg3: memref<4xi32, #tpu.memory_space<smem>>, %arg4: memref<4xi32, #tpu.memory_space<smem>>) -> (i32, i32, i32) {
    %c4_i32 = arith.constant 4 : i32
    %0 = arith.muli %arg0, %c4_i32 : i32
    %1 = arith.addi %0, %arg1 : i32
    %2 = arith.index_cast %1 : i32 to index
    %3 = memref.load %arg3[%2] : memref<4xi32, #tpu.memory_space<smem>>
    %4 = arith.muli %arg2, %3 : i32
    %c1_i32 = arith.constant 1 : i32
    %5 = arith.subi %c1_i32, %3 : i32
    %c0_i32 = arith.constant 0 : i32
    %6 = arith.muli %c0_i32, %5 : i32
    %7 = arith.addi %4, %6 : i32
    %8 = arith.index_cast %1 : i32 to index
    %9 = memref.load %arg4[%8] : memref<4xi32, #tpu.memory_space<smem>>
    %c0_i32_0 = arith.constant 0 : i32
    %c0_i32_1 = arith.constant 0 : i32
    return %9, %c0_i32_0, %7 : i32, i32, i32
  }
  func.func @transform_5(%arg0: i32, %arg1: i32, %arg2: i32, %arg3: memref<4xi32, #tpu.memory_space<smem>>, %arg4: memref<4xi32, #tpu.memory_space<smem>>) -> (i32, i32, i32) {
    %c4_i32 = arith.constant 4 : i32
    %0 = arith.muli %arg0, %c4_i32 : i32
    %1 = arith.addi %0, %arg1 : i32
    %2 = arith.index_cast %1 : i32 to index
    %3 = memref.load %arg4[%2] : memref<4xi32, #tpu.memory_space<smem>>
    %c0_i32 = arith.constant 0 : i32
    %c0_i32_0 = arith.constant 0 : i32
    %c0_i32_1 = arith.constant 0 : i32
    return %3, %c0_i32, %c0_i32_0 : i32, i32, i32
  }
  func.func @transform_6(%arg0: i32, %arg1: i32, %arg2: i32, %arg3: memref<4xi32, #tpu.memory_space<smem>>, %arg4: memref<4xi32, #tpu.memory_space<smem>>) -> (i32, i32) {
    %c0_i32 = arith.constant 0 : i32
    %c0_i32_0 = arith.constant 0 : i32
    return %arg0, %c0_i32 : i32, i32
  }
}

</mosaic_0001>

<llo_original>
// kernel: tpu_custom_call.1
$region0: #{tpu_custom_call.1}
  #allocation0 [shape = 'u32[]', space=smem, size = 0x4, offset = 0x4, fixed_abs, tag = 'smem constant byte address 0x4 - core index']
  #allocation1 [shape = 'u32[144,128]{1,0:T(1,128)}', space=vmem, size = 0x12000, scoped, tag = 'internal scratch']
  #allocation2 [shape = 'f32[256,128]{1,0:T(8,128)}', space=vmem, size = 0x20000, scoped, tag = 'scratch operand']
  #allocation3 [shape = 's32[1]{0}', space=sflag, size = 0x4, scoped, tag = 'scoped memory for tpu_custom_call.1']
  #allocation4 [shape = 'u8[512]{0}', space=smem, size = 0x200, scoped, tag = 'prefetched SMEM operand 0']
  #allocation5 [shape = 'u8[512]{0}', space=smem, size = 0x200, scoped, tag = 'prefetched SMEM operand 1']
  %s0 = inlined_call_operand.vmem [shape: s32[4], index: 0, kind: input, shape index: {}]
  %s1 = inlined_call_operand.vmem [shape: s32[4], index: 1, kind: input, shape index: {}]
  %s2 = inlined_call_operand.vmem [shape: bf16[256,128], index: 2, kind: input, shape index: {}]
  %s3 = inlined_call_operand.vmem [shape: f32[4,256,1], index: 3, kind: input, shape index: {}]
  %s4 = inlined_call_operand.vmem [shape: bf16[4,128,256], index: 4, kind: input, shape index: {}]
  %s5 = inlined_call_operand.vmem [shape: bf16[4,128,128], index: 5, kind: input, shape index: {}]
  %s6 = inlined_call_operand.vmem [shape: f32[4,1,256], index: 6, kind: input, shape index: {}]
  %s7 = inlined_call_operand.vmem [shape: f32[4,1,128], index: 7, kind: input, shape index: {}]
  %s8 = inlined_call_operand.hbm [shape: f32[256,128], index: 8, kind: output, shape index: {}]
  %s9 = sld [smem:[#allocation0]]
  $region73: #{tpu_custom_call.1} parent=0
    _
  %s11 = ssub.s32 1, %s9
  %s12 = scalar_select 0, %s11, %s9
  %s13 = sshll.u32 %s0, 4
  %s14 = int_to_ptr.vmem [resolvable:$true] %s13
  %16 = dma.vmem_to_smem %s14, 16, [#allocation4], [#allocation3]
  %s17 = sshll.u32 %s1, 4
  %s18 = int_to_ptr.vmem [resolvable:$true] %s17
  %20 = dma.vmem_to_smem %s18, 16, [#allocation5], [#allocation3]
  %21 = dma.done [#allocation3], 32
  %22 = sfence
  $region1: #{tpu_custom_call.1} parent=0
    #allocation6 [shape = 'u8[131072]{0}', space=vmem, size = 0x20000, scoped, tag = 'output window, operand 0, single buffered']
    #allocation7 [shape = 's32[2]{0}', space=sflag, size = 0x8, scoped, tag = 'scoped memory for tpu_custom_call.1']
    %23 = vsyncpa [#allocation7], 0
    loop: start=0, step=1, limit=6
    $region2: #{tpu_custom_call.1} parent=1 // loop_pre_header
      _
    $region3: #{tpu_custom_call.1} parent=1 // loop_header
      %s25 = sphi 0, %s29
      %p26 = scmp.ge.s32.totalorder %s25, 6
      %s32 = sphi 0, %s51
      %s33 = sphi 0, %s47
      %s34 = sphi 0, %s43
      %s35 = sphi 0, %s32
      %s36 = sphi 0, %s33
      %s37 = sphi 0, %s34
      %s38 = sphi 0, %s35
      %s39 = sphi 0, %s36
      %s40 = sphi 0, %s37
      %s54 = sphi 0, %s56
      %s57 = sphi 0, %s54
      %s58 = sphi 0, %s57
      %s74 = sphi 0, %s58
      %s88 = sphi 0, %s90
      %s91 = sphi 0, %s88
      %s92 = sphi 0, %s91
      %s108 = sphi 0, %s92
      %s126 = sphi 0, %s128
      %s129 = sphi 0, %s126
      %s130 = sphi 0, %s129
      %s146 = sphi 0, %s130
      %s164 = sphi 0, %s166
      %s167 = sphi 0, %s164
      %s168 = sphi 0, %s167
      %s184 = sphi 0, %s168
      %s202 = sphi 0, %s204
      %s205 = sphi 0, %s202
      %s206 = sphi 0, %s205
      %s222 = sphi 0, %s206
      %s234 = sphi 0, %s236
      %s237 = sphi 0, %s234
      %s238 = sphi 0, %s237
      %s254 = sphi 0, %s238
      %s260 = sphi 0, %s262
      %s263 = sphi 0, %s260
      %s264 = sphi 0, %s263
      %s280 = sphi 0, %s264
    $region4: #{tpu_custom_call.1} parent=1 // loop_header_branch
      %28 = sbr.rel (%p26) target = $region8
    $region5: #{tpu_custom_call.1} parent=1 // loop_body
      %s30 = ssub.s32 %s25, 1
      %s31 = ssub.s32 %s25, 2
      %s41 = sadd.s32 1, %s34
      %p42 = scmp.ge.s32.totalorder %s41, 1
      %s43 = scalar_select %p42, 0, %s41
      %s44 = sadd.s32 1, %s33
      %s45 = scalar_select %p42, %s44, %s33
      %p46 = scmp.ge.s32.totalorder %s45, 4
      %s47 = scalar_select %p46, 0, %s45
      %s48 = sadd.s32 1, %s32
      %s49 = scalar_select %p46, %s48, %s32
      %p50 = scmp.ge.s32.totalorder %s49, 1
      %s51 = scalar_select %p50, 0, %s49
      %s52 = ssub.s32 %s32, %s51
      %p53 = scmp.eq.s32.totalorder %s52, 0
      %s55 = sadd.s32 %s54, 1
      %s56 = scalar_select %p53, %s54, %s55
      %p59 = pneg %p53
      %p60 = scmp.eq.s32.totalorder %s25, 3
      %p61 = por %p59, %p60
      %p62 = scmp.ne.s32.totalorder %s54, %s57
      %p63 = scmp.eq.s32.totalorder %s25, 0
      %p64 = por %p62, %p63
      %p65 = scmp.ne.s32.totalorder %s54, %s57
      %p66 = scmp.eq.s32.totalorder %s30, 3
      %p67 = por %p65, %p66
      %p68 = scmp.ne.s32.totalorder %s57, %s58
      %p69 = scmp.eq.s32.totalorder %s30, 0
      %p70 = por %p68, %p69
      %p71 = scmp.ne.s32.totalorder %s57, %s58
      %p72 = scmp.eq.s32.totalorder %s31, 3
      %p73 = por %p71, %p72
      %p75 = scmp.ne.s32.totalorder %s58, %s74
      %p76 = scmp.eq.s32.totalorder %s31, 0
      %p77 = por %p75, %p76
      %s78 = smul.u32 %s32, 4
      %s79 = sadd.s32 %s78, %s33
      %s80 = sld [smem:[#allocation5 + %s79]]
      %s81 = smul.u32 %s51, 4
      %s82 = sadd.s32 %s81, %s47
      %s83 = sld [smem:[#allocation5 + %s82]]
      %s84 = ssub.s32 %s80, %s83
      %s85 = ssub.s32 %s32, %s51
      %s86 = sor.u32 %s84, %s85
      %p87 = scmp.eq.s32.totalorder %s86, 0
      %s89 = sadd.s32 %s88, 1
      %s90 = scalar_select %p87, %s88, %s89
      %p93 = pneg %p87
      %p94 = scmp.eq.s32.totalorder %s25, 3
      %p95 = por %p93, %p94
      %p96 = scmp.ne.s32.totalorder %s88, %s91
      %p97 = scmp.eq.s32.totalorder %s25, 0
      %p98 = por %p96, %p97
      %p99 = scmp.ne.s32.totalorder %s88, %s91
      %p100 = scmp.eq.s32.totalorder %s30, 3
      %p101 = por %p99, %p100
      %p102 = scmp.ne.s32.totalorder %s91, %s92
      %p103 = scmp.eq.s32.totalorder %s30, 0
      %p104 = por %p102, %p103
      %p105 = scmp.ne.s32.totalorder %s91, %s92
      %p106 = scmp.eq.s32.totalorder %s31, 3
      %p107 = por %p105, %p106
      %p109 = scmp.ne.s32.totalorder %s92, %s108
      %p110 = scmp.eq.s32.totalorder %s31, 0
      %p111 = por %p109, %p110
      %s112 = smul.u32 %s32, 4
      %s113 = sadd.s32 %s112, %s33
      %s114 = sld [smem:[#allocation4 + %s113]]
      %s115 = smul.u32 %s34, %s114
      %s116 = sld [smem:[#allocation5 + %s113]]
      %s117 = smul.u32 %s51, 4
      %s118 = sadd.s32 %s117, %s47
      %s119 = sld [smem:[#allocation4 + %s118]]
      %s120 = smul.u32 %s43, %s119
      %s121 = sld [smem:[#allocation5 + %s118]]
      %s122 = ssub.s32 %s116, %s121
      %s123 = ssub.s32 %s115, %s120
      %s124 = sor.u32 %s122, %s123
      %p125 = scmp.eq.s32.totalorder %s124, 0
      %s127 = sadd.s32 %s126, 1
      %s128 = scalar_select %p125, %s126, %s127
      %p131 = pneg %p125
      %p132 = scmp.eq.s32.totalorder %s25, 3
      %p133 = por %p131, %p132
      %p134 = scmp.ne.s32.totalorder %s126, %s129
      %p135 = scmp.eq.s32.totalorder %s25, 0
      %p136 = por %p134, %p135
      %p137 = scmp.ne.s32.totalorder %s126, %s129
      %p138 = scmp.eq.s32.totalorder %s30, 3
      %p139 = por %p137, %p138
      %p140 = scmp.ne.s32.totalorder %s129, %s130
      %p141 = scmp.eq.s32.totalorder %s30, 0
      %p142 = por %p140, %p141
      %p143 = scmp.ne.s32.totalorder %s129, %s130
      %p144 = scmp.eq.s32.totalorder %s31, 3
      %p145 = por %p143, %p144
      %p147 = scmp.ne.s32.totalorder %s130, %s146
      %p148 = scmp.eq.s32.totalorder %s31, 0
      %p149 = por %p147, %p148
      %s150 = smul.u32 %s32, 4
      %s151 = sadd.s32 %s150, %s33
      %s152 = sld [smem:[#allocation4 + %s151]]
      %s153 = smul.u32 %s34, %s152
      %s154 = sld [smem:[#allocation5 + %s151]]
      %s155 = smul.u32 %s51, 4
      %s156 = sadd.s32 %s155, %s47
      %s157 = sld [smem:[#allocation4 + %s156]]
      %s158 = smul.u32 %s43, %s157
      %s159 = sld [smem:[#allocation5 + %s156]]
      %s160 = ssub.s32 %s154, %s159
      %s161 = ssub.s32 %s153, %s158
      %s162 = sor.u32 %s160, %s161
      %p163 = scmp.eq.s32.totalorder %s162, 0
      %s165 = sadd.s32 %s164, 1
      %s166 = scalar_select %p163, %s164, %s165
      %p169 = pneg %p163
      %p170 = scmp.eq.s32.totalorder %s25, 3
      %p171 = por %p169, %p170
      %p172 = scmp.ne.s32.totalorder %s164, %s167
      %p173 = scmp.eq.s32.totalorder %s25, 0
      %p174 = por %p172, %p173
      %p175 = scmp.ne.s32.totalorder %s164, %s167
      %p176 = scmp.eq.s32.totalorder %s30, 3
      %p177 = por %p175, %p176
      %p178 = scmp.ne.s32.totalorder %s167, %s168
      %p179 = scmp.eq.s32.totalorder %s30, 0
      %p180 = por %p178, %p179
      %p181 = scmp.ne.s32.totalorder %s167, %s168
      %p182 = scmp.eq.s32.totalorder %s31, 3
      %p183 = por %p181, %p182
      %p185 = scmp.ne.s32.totalorder %s168, %s184
      %p186 = scmp.eq.s32.totalorder %s31, 0
      %p187 = por %p185, %p186
      %s188 = smul.u32 %s32, 4
      %s189 = sadd.s32 %s188, %s33
      %s190 = sld [smem:[#allocation4 + %s189]]
      %s191 = smul.u32 %s34, %s190
      %s192 = sld [smem:[#allocation5 + %s189]]
      %s193 = smul.u32 %s51, 4
      %s194 = sadd.s32 %s193, %s47
      %s195 = sld [smem:[#allocation4 + %s194]]
      %s196 = smul.u32 %s43, %s195
      %s197 = sld [smem:[#allocation5 + %s194]]
      %s198 = ssub.s32 %s192, %s197
      %s199 = ssub.s32 %s191, %s196
      %s200 = sor.u32 %s198, %s199
      %p201 = scmp.eq.s32.totalorder %s200, 0
      %s203 = sadd.s32 %s202, 1
      %s204 = scalar_select %p201, %s202, %s203
      %p207 = pneg %p201
      %p208 = scmp.eq.s32.totalorder %s25, 3
      %p209 = por %p207, %p208
      %p210 = scmp.ne.s32.totalorder %s202, %s205
      %p211 = scmp.eq.s32.totalorder %s25, 0
      %p212 = por %p210, %p211
      %p213 = scmp.ne.s32.totalorder %s202, %s205
      %p214 = scmp.eq.s32.totalorder %s30, 3
      %p215 = por %p213, %p214
      %p216 = scmp.ne.s32.totalorder %s205, %s206
      %p217 = scmp.eq.s32.totalorder %s30, 0
      %p218 = por %p216, %p217
      %p219 = scmp.ne.s32.totalorder %s205, %s206
      %p220 = scmp.eq.s32.totalorder %s31, 3
      %p221 = por %p219, %p220
      %p223 = scmp.ne.s32.totalorder %s206, %s222
      %p224 = scmp.eq.s32.totalorder %s31, 0
      %p225 = por %p223, %p224
      %s226 = smul.u32 %s32, 4
      %s227 = sadd.s32 %s226, %s33
      %s228 = sld [smem:[#allocation5 + %s227]]
      %s229 = smul.u32 %s51, 4
      %s230 = sadd.s32 %s229, %s47
      %s231 = sld [smem:[#allocation5 + %s230]]
      %s232 = ssub.s32 %s228, %s231
      %p233 = scmp.eq.s32.totalorder %s232, 0
      %s235 = sadd.s32 %s234, 1
      %s236 = scalar_select %p233, %s234, %s235
      %p239 = pneg %p233
      %p240 = scmp.eq.s32.totalorder %s25, 3
      %p241 = por %p239, %p240
      %p242 = scmp.ne.s32.totalorder %s234, %s237
      %p243 = scmp.eq.s32.totalorder %s25, 0
      %p244 = por %p242, %p243
      %p245 = scmp.ne.s32.totalorder %s234, %s237
      %p246 = scmp.eq.s32.totalorder %s30, 3
      %p247 = por %p245, %p246
      %p248 = scmp.ne.s32.totalorder %s237, %s238
      %p249 = scmp.eq.s32.totalorder %s30, 0
      %p250 = por %p248, %p249
      %p251 = scmp.ne.s32.totalorder %s237, %s238
      %p252 = scmp.eq.s32.totalorder %s31, 3
      %p253 = por %p251, %p252
      %p255 = scmp.ne.s32.totalorder %s238, %s254
      %p256 = scmp.eq.s32.totalorder %s31, 0
      %p257 = por %p255, %p256
      %s258 = ssub.s32 %s32, %s51
      %p259 = scmp.eq.s32.totalorder %s258, 0
      %s261 = sadd.s32 %s260, 1
      %s262 = scalar_select %p259, %s260, %s261
      %p265 = pneg %p259
      %p266 = scmp.eq.s32.totalorder %s25, 3
      %p267 = por %p265, %p266
      %p268 = scmp.ne.s32.totalorder %s260, %s263
      %p269 = scmp.eq.s32.totalorder %s25, 0
      %p270 = por %p268, %p269
      %p271 = scmp.ne.s32.totalorder %s260, %s263
      %p272 = scmp.eq.s32.totalorder %s30, 3
      %p273 = por %p271, %p272
      %p274 = scmp.ne.s32.totalorder %s263, %s264
      %p275 = scmp.eq.s32.totalorder %s30, 0
      %p276 = por %p274, %p275
      %p277 = scmp.ne.s32.totalorder %s263, %s264
      %p278 = scmp.eq.s32.totalorder %s31, 3
      %p279 = por %p277, %p278
      %p281 = scmp.ne.s32.totalorder %s264, %s280
      %p282 = scmp.eq.s32.totalorder %s31, 0
      %p283 = por %p281, %p282
      %p284 = scmp.le.s32.totalorder 1, %s25
      %p285 = scmp.lt.s32.totalorder %s25, 5
      %p286 = pnand %p284, %p285
      %p287 = pneg %p286
      // Predicated region
      $region9: #{tpu_custom_call.1} parent=5 // pred_check
        _
      $region10: #{tpu_custom_call.1} parent=5 // pred_check_branch
        %289 = sbr.rel (%p286) target = $region12
      $region11: #{tpu_custom_call.1} parent=5 // pred_region
        %s290 = ssub.s32 %s25, 1
        // Predicated region
        $region13: #{tpu_custom_call.1} parent=11 // pred_check
          %p291 = pneg %p70
        $region14: #{tpu_custom_call.1} parent=11 // pred_check_branch
          %293 = sbr.rel (%p291) target = $region16
        $region15: #{tpu_custom_call.1} parent=11 // pred_region
          %s294 = smul.u32 32, %s35
          %p295 = scmp.lt.s32.totalorder %s294, 31
          %s296 = scalar_select %p295, %s294, 31
          %s297 = smul.addr %s296, 4
          %s298 = scalar_lea.vmem %s2, %s297
          %s299 = smul.u32 32, %s35
        $region16: #{tpu_custom_call.1} parent=11 // pred_fallthru
          _
      $region12: #{tpu_custom_call.1} parent=5 // pred_fallthru
        _
      %p300 = scmp.lt.s32.totalorder %s25, 4
      // Predicated region
      $region17: #{tpu_custom_call.1} parent=5 // pred_check
        %p301 = pneg %p300
      $region18: #{tpu_custom_call.1} parent=5 // pred_check_branch
        %303 = sbr.rel (%p301) target = $region20
      $region19: #{tpu_custom_call.1} parent=5 // pred_region
        // Predicated region
        $region21: #{tpu_custom_call.1} parent=19 // pred_check
          %p304 = pneg %p98
        $region22: #{tpu_custom_call.1} parent=19 // pred_check_branch
          %306 = sbr.rel (%p304) target = $region24
        $region23: #{tpu_custom_call.1} parent=19 // pred_region
          %s307 = smul.u32 %s32, 4
          %s308 = sadd.s32 %s307, %s33
          %s309 = sld [smem:[#allocation5 + %s308]]
          %s310 = smul.u32 32, %s32
          %p311 = scmp.lt.s32.totalorder %s309, 3
          %s312 = scalar_select %p311, %s309, 3
          %p313 = scmp.lt.s32.totalorder %s310, 31
          %s314 = scalar_select %p313, %s310, 31
          %s315 = smul.addr %s312, 32
          %s316 = sadd.s32 %s314, %s315
          %s317 = smul.addr %s316, 8
          %s318 = scalar_lea.vmem %s3, %s317
          %s319 = smul.u32 %s32, 4
          %s320 = sadd.s32 %s319, %s33
          %s321 = sld [smem:[#allocation5 + %s320]]
          %s322 = smul.u32 32, %s32
        $region24: #{tpu_custom_call.1} parent=19 // pred_fallthru
          _
        // Predicated region
        $region25: #{tpu_custom_call.1} parent=19 // pred_check
          %p323 = pneg %p136
        $region26: #{tpu_custom_call.1} parent=19 // pred_check_branch
          %325 = sbr.rel (%p323) target = $region28
        $region27: #{tpu_custom_call.1} parent=19 // pred_region
          %s326 = smul.u32 %s32, 4
          %s327 = sadd.s32 %s326, %s33
          %s328 = sld [smem:[#allocation4 + %s327]]
          %s329 = smul.u32 %s34, %s328
          %s330 = sld [smem:[#allocation5 + %s327]]
          %s331 = smul.u32 2, %s329
          %p332 = scmp.lt.s32.totalorder %s330, 3
          %s333 = scalar_select %p332, %s330, 3
          %p334 = scmp.lt.s32.totalorder %s331, 1
          %s335 = scalar_select %p334, %s331, 1
          %s336 = smul.addr %s333, 32
          %s337 = sadd.s32 %s335, %s336
          %s338 = smul.addr %s337, 4
          %s339 = scalar_lea.vmem %s4, %s338
          %s340 = smul.u32 %s32, 4
          %s341 = sadd.s32 %s340, %s33
          %s342 = sld [smem:[#allocation4 + %s341]]
          %s343 = smul.u32 %s34, %s342
          %s344 = sld [smem:[#allocation5 + %s341]]
          %s345 = smul.u32 2, %s343
        $region28: #{tpu_custom_call.1} parent=19 // pred_fallthru
          _
        // Predicated region
        $region29: #{tpu_custom_call.1} parent=19 // pred_check
          %p346 = pneg %p174
        $region30: #{tpu_custom_call.1} parent=19 // pred_check_branch
          %348 = sbr.rel (%p346) target = $region32
        $region31: #{tpu_custom_call.1} parent=19 // pred_region
          %s349 = smul.u32 %s32, 4
          %s350 = sadd.s32 %s349, %s33
          %s351 = sld [smem:[#allocation4 + %s350]]
          %s352 = smul.u32 %s34, %s351
          %s353 = sld [smem:[#allocation5 + %s350]]
          %s354 = smul.u32 16, %s352
          %p355 = scmp.lt.s32.totalorder %s353, 3
          %s356 = scalar_select %p355, %s353, 3
          %p357 = scmp.lt.s32.totalorder %s354, 15
          %s358 = scalar_select %p357, %s354, 15
          %s359 = smul.addr %s356, 16
          %s360 = sadd.s32 %s358, %s359
          %s361 = smul.addr %s360, 4
          %s362 = scalar_lea.vmem %s5, %s361
          %s363 = smul.u32 %s32, 4
          %s364 = sadd.s32 %s363, %s33
          %s365 = sld [smem:[#allocation4 + %s364]]
          %s366 = smul.u32 %s34, %s365
          %s367 = sld [smem:[#allocation5 + %s364]]
          %s368 = smul.u32 16, %s366
        $region32: #{tpu_custom_call.1} parent=19 // pred_fallthru
          _
        // Predicated region
        $region33: #{tpu_custom_call.1} parent=19 // pred_check
          %p369 = pneg %p212
        $region34: #{tpu_custom_call.1} parent=19 // pred_check_branch
          %371 = sbr.rel (%p369) target = $region36
        $region35: #{tpu_custom_call.1} parent=19 // pred_region
          %s372 = smul.u32 %s32, 4
          %s373 = sadd.s32 %s372, %s33
          %s374 = sld [smem:[#allocation4 + %s373]]
          %s375 = smul.u32 %s34, %s374
          %s376 = sld [smem:[#allocation5 + %s373]]
          %s377 = smul.u32 2, %s375
          %p378 = scmp.lt.s32.totalorder %s376, 3
          %s379 = scalar_select %p378, %s376, 3
          %p380 = scmp.lt.s32.totalorder %s377, 1
          %s381 = scalar_select %p380, %s377, 1
          %s382 = smul.addr %s379, 2
          %s383 = sadd.s32 %s381, %s382
          %s384 = scalar_lea.vmem %s6, %s383
          %s385 = smul.u32 %s32, 4
          %s386 = sadd.s32 %s385, %s33
          %s387 = sld [smem:[#allocation4 + %s386]]
          %s388 = smul.u32 %s34, %s387
          %s389 = sld [smem:[#allocation5 + %s386]]
          %s390 = smul.u32 2, %s388
        $region36: #{tpu_custom_call.1} parent=19 // pred_fallthru
          _
        // Predicated region
        $region37: #{tpu_custom_call.1} parent=19 // pred_check
          %p391 = pneg %p244
        $region38: #{tpu_custom_call.1} parent=19 // pred_check_branch
          %393 = sbr.rel (%p391) target = $region40
        $region39: #{tpu_custom_call.1} parent=19 // pred_region
          %s394 = smul.u32 %s32, 4
          %s395 = sadd.s32 %s394, %s33
          %s396 = sld [smem:[#allocation5 + %s395]]
          %p397 = scmp.lt.s32.totalorder %s396, 3
          %s398 = scalar_select %p397, %s396, 3
          %s399 = scalar_lea.vmem %s7, %s398
          %s400 = smul.u32 %s32, 4
          %s401 = sadd.s32 %s400, %s33
          %s402 = sld [smem:[#allocation5 + %s401]]
        $region40: #{tpu_custom_call.1} parent=19 // pred_fallthru
          _
      $region20: #{tpu_custom_call.1} parent=5 // pred_fallthru
        _
      %p403 = scmp.le.s32.totalorder 1, %s25
      %p404 = scmp.lt.s32.totalorder %s25, 5
      %p405 = pnand %p403, %p404
      %p406 = pneg %p405
      // Predicated region
      $region41: #{tpu_custom_call.1} parent=5 // pred_check
        _
      $region42: #{tpu_custom_call.1} parent=5 // pred_check_branch
        %408 = sbr.rel (%p405) target = $region44
      $region43: #{tpu_custom_call.1} parent=5 // pred_region
        %s409 = ssub.s32 %s25, 1
        %s410 = smul.u32 32, %s35
        %p411 = scmp.lt.s32.totalorder %s410, 31
        %s412 = scalar_select %p411, %s410, 31
        %s413 = smul.addr %s412, 4
        %s414 = scalar_lea.vmem %s2, %s413
        %p415 = pneg %p70
        %p416 = pneg %p67
        %s417 = smul.u32 %s35, 4
        %s418 = sadd.s32 %s417, %s36
        %s419 = sld [smem:[#allocation5 + %s418]]
        %s420 = smul.u32 32, %s35
        %p421 = scmp.lt.s32.totalorder %s419, 3
        %s422 = scalar_select %p421, %s419, 3
        %p423 = scmp.lt.s32.totalorder %s420, 31
        %s424 = scalar_select %p423, %s420, 31
        %s425 = smul.addr %s422, 32
        %s426 = sadd.s32 %s424, %s425
        %s427 = smul.addr %s426, 8
        %s428 = scalar_lea.vmem %s3, %s427
        %p429 = pneg %p104
        %p430 = pneg %p101
        %s431 = smul.u32 %s35, 4
        %s432 = sadd.s32 %s431, %s36
        %s433 = sld [smem:[#allocation4 + %s432]]
        %s434 = smul.u32 %s37, %s433
        %s435 = sld [smem:[#allocation5 + %s432]]
        %s436 = smul.u32 2, %s434
        %p437 = scmp.lt.s32.totalorder %s435, 3
        %s438 = scalar_select %p437, %s435, 3
        %p439 = scmp.lt.s32.totalorder %s436, 1
        %s440 = scalar_select %p439, %s436, 1
        %s441 = smul.addr %s438, 32
        %s442 = sadd.s32 %s440, %s441
        %s443 = smul.addr %s442, 4
        %s444 = scalar_lea.vmem %s4, %s443
        %p445 = pneg %p142
        %p446 = pneg %p139
        %s447 = smul.u32 %s35, 4
        %s448 = sadd.s32 %s447, %s36
        %s449 = sld [smem:[#allocation4 + %s448]]
        %s450 = smul.u32 %s37, %s449
        %s451 = sld [smem:[#allocation5 + %s448]]
        %s452 = smul.u32 16, %s450
        %p453 = scmp.lt.s32.totalorder %s451, 3
        %s454 = scalar_select %p453, %s451, 3
        %p455 = scmp.lt.s32.totalorder %s452, 15
        %s456 = scalar_select %p455, %s452, 15
        %s457 = smul.addr %s454, 16
        %s458 = sadd.s32 %s456, %s457
        %s459 = smul.addr %s458, 4
        %s460 = scalar_lea.vmem %s5, %s459
        %p461 = pneg %p180
        %p462 = pneg %p177
        %s463 = smul.u32 %s35, 4
        %s464 = sadd.s32 %s463, %s36
        %s465 = sld [smem:[#allocation4 + %s464]]
        %s466 = smul.u32 %s37, %s465
        %s467 = sld [smem:[#allocation5 + %s464]]
        %s468 = smul.u32 2, %s466
        %p469 = scmp.lt.s32.totalorder %s467, 3
        %s470 = scalar_select %p469, %s467, 3
        %p471 = scmp.lt.s32.totalorder %s468, 1
        %s472 = scalar_select %p471, %s468, 1
        %s473 = smul.addr %s470, 2
        %s474 = sadd.s32 %s472, %s473
        %s475 = scalar_lea.vmem %s6, %s474
        %p476 = pneg %p218
        %p477 = pneg %p215
        %s478 = smul.u32 %s35, 4
        %s479 = sadd.s32 %s478, %s36
        %s480 = sld [smem:[#allocation5 + %s479]]
        %p481 = scmp.lt.s32.totalorder %s480, 3
        %s482 = scalar_select %p481, %s480, 3
        %s483 = scalar_lea.vmem %s7, %s482
        %p484 = pneg %p250
        %p485 = pneg %p247
        %p486 = pneg %p276
        %p487 = pneg %p273
        %s488 = smul.u32 32, %s35
        %p489 = scmp.lt.s32.totalorder %s488, 31
        %s490 = scalar_select %p489, %s488, 31
        %s491 = smul.addr %s490, 4
        %s492 = scalar_lea.vmem %s2, %s491
        %s493 = smul.u32 32, %s35
        %s494 = smul.u32 %s35, 4
        %s495 = sadd.s32 %s494, %s36
        %s496 = sld [smem:[#allocation5 + %s495]]
        %s497 = smul.u32 32, %s35
        %p498 = scmp.lt.s32.totalorder %s496, 3
        %s499 = scalar_select %p498, %s496, 3
        %p500 = scmp.lt.s32.totalorder %s497, 31
        %s501 = scalar_select %p500, %s497, 31
        %s502 = smul.addr %s499, 32
        %s503 = sadd.s32 %s501, %s502
        %s504 = smul.addr %s503, 8
        %s505 = scalar_lea.vmem %s3, %s504
        %s506 = smul.u32 %s35, 4
        %s507 = sadd.s32 %s506, %s36
        %s508 = sld [smem:[#allocation5 + %s507]]
        %s509 = smul.u32 32, %s35
        %s510 = smul.u32 %s35, 4
        %s511 = sadd.s32 %s510, %s36
        %s512 = sld [smem:[#allocation4 + %s511]]
        %s513 = smul.u32 %s37, %s512
        %s514 = sld [smem:[#allocation5 + %s511]]
        %s515 = smul.u32 2, %s513
        %p516 = scmp.lt.s32.totalorder %s514, 3
        %s517 = scalar_select %p516, %s514, 3
        %p518 = scmp.lt.s32.totalorder %s515, 1
        %s519 = scalar_select %p518, %s515, 1
        %s520 = smul.addr %s517, 32
        %s521 = sadd.s32 %s519, %s520
        %s522 = smul.addr %s521, 4
        %s523 = scalar_lea.vmem %s4, %s522
        %s524 = smul.u32 %s35, 4
        %s525 = sadd.s32 %s524, %s36
        %s526 = sld [smem:[#allocation4 + %s525]]
        %s527 = smul.u32 %s37, %s526
        %s528 = sld [smem:[#allocation5 + %s525]]
        %s529 = smul.u32 2, %s527
        %s530 = smul.u32 %s35, 4
        %s531 = sadd.s32 %s530, %s36
        %s532 = sld [smem:[#allocation4 + %s531]]
        %s533 = smul.u32 %s37, %s532
        %s534 = sld [smem:[#allocation5 + %s531]]
        %s535 = smul.u32 16, %s533
        %p536 = scmp.lt.s32.totalorder %s534, 3
        %s537 = scalar_select %p536, %s534, 3
        %p538 = scmp.lt.s32.totalorder %s535, 15
        %s539 = scalar_select %p538, %s535, 15
        %s540 = smul.addr %s537, 16
        %s541 = sadd.s32 %s539, %s540
        %s542 = smul.addr %s541, 4
        %s543 = scalar_lea.vmem %s5, %s542
        %s544 = smul.u32 %s35, 4
        %s545 = sadd.s32 %s544, %s36
        %s546 = sld [smem:[#allocation4 + %s545]]
        %s547 = smul.u32 %s37, %s546
        %s548 = sld [smem:[#allocation5 + %s545]]
        %s549 = smul.u32 16, %s547
        %s550 = smul.u32 %s35, 4
        %s551 = sadd.s32 %s550, %s36
        %s552 = sld [smem:[#allocation4 + %s551]]
        %s553 = smul.u32 %s37, %s552
        %s554 = sld [smem:[#allocation5 + %s551]]
        %s555 = smul.u32 2, %s553
        %p556 = scmp.lt.s32.totalorder %s554, 3
        %s557 = scalar_select %p556, %s554, 3
        %p558 = scmp.lt.s32.totalorder %s555, 1
        %s559 = scalar_select %p558, %s555, 1
        %s560 = smul.addr %s557, 2
        %s561 = sadd.s32 %s559, %s560
        %s562 = scalar_lea.vmem %s6, %s561
        %s563 = smul.u32 %s35, 4
        %s564 = sadd.s32 %s563, %s36
        %s565 = sld [smem:[#allocation4 + %s564]]
        %s566 = smul.u32 %s37, %s565
        %s567 = sld [smem:[#allocation5 + %s564]]
        %s568 = smul.u32 2, %s566
        %s569 = smul.u32 %s35, 4
        %s570 = sadd.s32 %s569, %s36
        %s571 = sld [smem:[#allocation5 + %s570]]
        %p572 = scmp.lt.s32.totalorder %s571, 3
        %s573 = scalar_select %p572, %s571, 3
        %s574 = scalar_lea.vmem %s7, %s573
        %s575 = smul.u32 %s35, 4
        %s576 = sadd.s32 %s575, %s36
        %s577 = sld [smem:[#allocation5 + %s576]]
        %s578 = smul.u32 32, %s35
        %p580 = scmp.eq.s32.totalorder %s36, 0
        %p581 = scmp.eq.s32.totalorder %s37, 0
        %p582 = pnand %p580, %p581
        %p583 = pneg %p582
        // Predicated region
        $region45: #{tpu_custom_call.1} parent=43 // pred_check
          _
        $region46: #{tpu_custom_call.1} parent=43 // pred_check_branch
          %585 = sbr.rel (%p582) target = $region48
        $region47: #{tpu_custom_call.1} parent=43 // pred_region
          %586 = vst [vmem:[#allocation2] sm:$0xff] 0.0
          %587 = vst [vmem:[#allocation2 + $0x8] sm:$0xff] 0.0
          %588 = vst [vmem:[#allocation2 + $0x10] sm:$0xff] 0.0
          %589 = vst [vmem:[#allocation2 + $0x18] sm:$0xff] 0.0
          %590 = vst [vmem:[#allocation2 + $0x20] sm:$0xff] 0.0
          %591 = vst [vmem:[#allocation2 + $0x28] sm:$0xff] 0.0
          %592 = vst [vmem:[#allocation2 + $0x30] sm:$0xff] 0.0
          %593 = vst [vmem:[#allocation2 + $0x38] sm:$0xff] 0.0
          %594 = vst [vmem:[#allocation2 + $0x40] sm:$0xff] 0.0
          %595 = vst [vmem:[#allocation2 + $0x48] sm:$0xff] 0.0
          %596 = vst [vmem:[#allocation2 + $0x50] sm:$0xff] 0.0
          %597 = vst [vmem:[#allocation2 + $0x58] sm:$0xff] 0.0
          %598 = vst [vmem:[#allocation2 + $0x60] sm:$0xff] 0.0
          %599 = vst [vmem:[#allocation2 + $0x68] sm:$0xff] 0.0
          %600 = vst [vmem:[#allocation2 + $0x70] sm:$0xff] 0.0
          %601 = vst [vmem:[#allocation2 + $0x78] sm:$0xff] 0.0
          %602 = vst [vmem:[#allocation2 + $0x80] sm:$0xff] 0.0
          %603 = vst [vmem:[#allocation2 + $0x88] sm:$0xff] 0.0
          %604 = vst [vmem:[#allocation2 + $0x90] sm:$0xff] 0.0
          %605 = vst [vmem:[#allocation2 + $0x98] sm:$0xff] 0.0
          %606 = vst [vmem:[#allocation2 + $0xa0] sm:$0xff] 0.0
          %607 = vst [vmem:[#allocation2 + $0xa8] sm:$0xff] 0.0
          %608 = vst [vmem:[#allocation2 + $0xb0] sm:$0xff] 0.0
          %609 = vst [vmem:[#allocation2 + $0xb8] sm:$0xff] 0.0
          %610 = vst [vmem:[#allocation2 + $0xc0] sm:$0xff] 0.0
          %611 = vst [vmem:[#allocation2 + $0xc8] sm:$0xff] 0.0
          %612 = vst [vmem:[#allocation2 + $0xd0] sm:$0xff] 0.0
          %613 = vst [vmem:[#allocation2 + $0xd8] sm:$0xff] 0.0
          %614 = vst [vmem:[#allocation2 + $0xe0] sm:$0xff] 0.0
          %615 = vst [vmem:[#allocation2 + $0xe8] sm:$0xff] 0.0
          %616 = vst [vmem:[#allocation2 + $0xf0] sm:$0xff] 0.0
          %617 = vst [vmem:[#allocation2 + $0xf8] sm:$0xff] 0.0
        $region48: #{tpu_custom_call.1} parent=43 // pred_fallthru
          _
        %s618 = smul.u32 %s35, 4
        %s619 = sadd.s32 %s618, %s36
        %s620 = sld [smem:[#allocation4 + %s619]]
        %p621 = scmp.ne.s32.totalorder %s620, 0
        // Predicated region
        $region49: #{tpu_custom_call.1} parent=43 // pred_check
          %p622 = pneg %p621
        $region50: #{tpu_custom_call.1} parent=43 // pred_check_branch
          %624 = sbr.rel (%p622) target = $region52
        $region51: #{tpu_custom_call.1} parent=43 // pred_region
          %v625 = vld [vmem:[%s492] sm:$0xf]
          %v626 = vld [vmem:[%s492 + $0x4] sm:$0xf]
          %v627 = vld [vmem:[%s492 + $0x8] sm:$0xf]
          %v628 = vld [vmem:[%s492 + $0xc] sm:$0xf]
          %v629 = vld [vmem:[%s492 + $0x10] sm:$0xf]
          %v630 = vld [vmem:[%s492 + $0x14] sm:$0xf]
          %v631 = vld [vmem:[%s492 + $0x18] sm:$0xf]
          %v632 = vld [vmem:[%s492 + $0x1c] sm:$0xf]
          %v633 = vld [vmem:[%s492 + $0x20] sm:$0xf]
          %v634 = vld [vmem:[%s492 + $0x24] sm:$0xf]
          %v635 = vld [vmem:[%s492 + $0x28] sm:$0xf]
          %v636 = vld [vmem:[%s492 + $0x2c] sm:$0xf]
          %v637 = vld [vmem:[%s492 + $0x30] sm:$0xf]
          %v638 = vld [vmem:[%s492 + $0x34] sm:$0xf]
          %v639 = vld [vmem:[%s492 + $0x38] sm:$0xf]
          %v640 = vld [vmem:[%s492 + $0x3c] sm:$0xf]
          %v641 = vld [vmem:[%s492 + $0x40] sm:$0xf]
          %v642 = vld [vmem:[%s492 + $0x44] sm:$0xf]
          %v643 = vld [vmem:[%s492 + $0x48] sm:$0xf]
          %v644 = vld [vmem:[%s492 + $0x4c] sm:$0xf]
          %v645 = vld [vmem:[%s492 + $0x50] sm:$0xf]
          %v646 = vld [vmem:[%s492 + $0x54] sm:$0xf]
          %v647 = vld [vmem:[%s492 + $0x58] sm:$0xf]
          %v648 = vld [vmem:[%s492 + $0x5c] sm:$0xf]
          %v649 = vld [vmem:[%s492 + $0x60] sm:$0xf]
          %v650 = vld [vmem:[%s492 + $0x64] sm:$0xf]
          %v651 = vld [vmem:[%s492 + $0x68] sm:$0xf]
          %v652 = vld [vmem:[%s492 + $0x6c] sm:$0xf]
          %v653 = vld [vmem:[%s492 + $0x70] sm:$0xf]
          %v654 = vld [vmem:[%s492 + $0x74] sm:$0xf]
          %v655 = vld [vmem:[%s492 + $0x78] sm:$0xf]
          %v656 = vld [vmem:[%s492 + $0x7c] sm:$0xf]
          %v657 = vld [vmem:[%s523] sm:$0xff]
          %v658 = vld [vmem:[%s523 + $0x8] sm:$0xff]
          %v659 = vld [vmem:[%s523 + $0x10] sm:$0xff]
          %v660 = vld [vmem:[%s523 + $0x18] sm:$0xff]
          %v661 = vld [vmem:[%s523 + $0x20] sm:$0xff]
          %v662 = vld [vmem:[%s523 + $0x28] sm:$0xff]
          %v663 = vld [vmem:[%s523 + $0x30] sm:$0xff]
          %v664 = vld [vmem:[%s523 + $0x38] sm:$0xff]
          %v665 = vld [vmem:[%s523 + $0x40] sm:$0xff]
          %v666 = vld [vmem:[%s523 + $0x48] sm:$0xff]
          %v667 = vld [vmem:[%s523 + $0x50] sm:$0xff]
          %v668 = vld [vmem:[%s523 + $0x58] sm:$0xff]
          %v669 = vld [vmem:[%s523 + $0x60] sm:$0xff]
          %v670 = vld [vmem:[%s523 + $0x68] sm:$0xff]
          %v671 = vld [vmem:[%s523 + $0x70] sm:$0xff]
          %v672 = vld [vmem:[%s523 + $0x78] sm:$0xff]
          %v673 = vld [vmem:[%s562] sm:$0x3]
          %v675 = vlaneseq
          %v676 = vshrl.u32 %v675, 7
          %v677 = vsub.s32 0, %v676
          %v678 = vrot.slane %v673, %v677
          %v679 = vlaneseq
          %v680 = vshrl.u32 %v679, 7
          %v681 = vsub.s32 1, %v680
          %v682 = vrot.slane %v673, %v681
          %v717 = vunpack.c.l.b16 %v625
          %v718 = vunpack.c.l.b16 %v626
          %v719 = vunpack.c.l.b16 %v627
          %v720 = vunpack.c.l.b16 %v628
          %v721 = vunpack.c.l.b16 %v629
          %v722 = vunpack.c.l.b16 %v630
          %v723 = vunpack.c.l.b16 %v631
          %v724 = vunpack.c.l.b16 %v632
          %v725 = vunpack.c.l.b16 %v633
          %v726 = vunpack.c.l.b16 %v634
          %v727 = vunpack.c.l.b16 %v635
          %v728 = vunpack.c.l.b16 %v636
          %v729 = vunpack.c.l.b16 %v637
          %v730 = vunpack.c.l.b16 %v638
          %v731 = vunpack.c.l.b16 %v639
          %v732 = vunpack.c.l.b16 %v640
          %v733 = vunpack.c.l.b16 %v641
          %v734 = vunpack.c.l.b16 %v642
          %v735 = vunpack.c.l.b16 %v643
          %v736 = vunpack.c.l.b16 %v644
          %v737 = vunpack.c.l.b16 %v645
          %v738 = vunpack.c.l.b16 %v646
          %v739 = vunpack.c.l.b16 %v647
          %v740 = vunpack.c.l.b16 %v648
          %v741 = vunpack.c.l.b16 %v649
          %v742 = vunpack.c.l.b16 %v650
          %v743 = vunpack.c.l.b16 %v651
          %v744 = vunpack.c.l.b16 %v652
          %v745 = vunpack.c.l.b16 %v653
          %v746 = vunpack.c.l.b16 %v654
          %v747 = vunpack.c.l.b16 %v655
          %v748 = vunpack.c.l.b16 %v656
          %v749 = vpack.c.b16 %v718, %v717
          %v750 = vpack.c.b16 %v720, %v719
          %v751 = vpack.c.b16 %v722, %v721
          %v752 = vpack.c.b16 %v724, %v723
          %v753 = vpack.c.b16 %v726, %v725
          %v754 = vpack.c.b16 %v728, %v727
          %v755 = vpack.c.b16 %v730, %v729
          %v756 = vpack.c.b16 %v732, %v731
          %v757 = vpack.c.b16 %v734, %v733
          %v758 = vpack.c.b16 %v736, %v735
          %v759 = vpack.c.b16 %v738, %v737
          %v760 = vpack.c.b16 %v740, %v739
          %v761 = vpack.c.b16 %v742, %v741
          %v762 = vpack.c.b16 %v744, %v743
          %v763 = vpack.c.b16 %v746, %v745
          %v764 = vpack.c.b16 %v748, %v747
          %v797 = vunpack.c.l.b16 %v657
          %v798 = vunpack.c.h.b16 %v657
          %v799 = vunpack.c.l.b16 %v658
          %v800 = vunpack.c.h.b16 %v658
          %v801 = vunpack.c.l.b16 %v659
          %v802 = vunpack.c.h.b16 %v659
          %v803 = vunpack.c.l.b16 %v660
          %v804 = vunpack.c.h.b16 %v660
          %v805 = vunpack.c.l.b16 %v661
          %v806 = vunpack.c.h.b16 %v661
          %v807 = vunpack.c.l.b16 %v662
          %v808 = vunpack.c.h.b16 %v662
          %v809 = vunpack.c.l.b16 %v663
          %v810 = vunpack.c.h.b16 %v663
          %v811 = vunpack.c.l.b16 %v664
          %v812 = vunpack.c.h.b16 %v664
          %v813 = vunpack.c.l.b16 %v665
          %v814 = vunpack.c.h.b16 %v665
          %v815 = vunpack.c.l.b16 %v666
          %v816 = vunpack.c.h.b16 %v666
          %v817 = vunpack.c.l.b16 %v667
          %v818 = vunpack.c.h.b16 %v667
          %v819 = vunpack.c.l.b16 %v668
          %v820 = vunpack.c.h.b16 %v668
          %v821 = vunpack.c.l.b16 %v669
          %v822 = vunpack.c.h.b16 %v669
          %v823 = vunpack.c.l.b16 %v670
          %v824 = vunpack.c.h.b16 %v670
          %v825 = vunpack.c.l.b16 %v671
          %v826 = vunpack.c.h.b16 %v671
          %v827 = vunpack.c.l.b16 %v672
          %v828 = vunpack.c.h.b16 %v672
          %v829 = vpack.c.b16 %v799, %v797
          %v830 = vpack.c.b16 %v800, %v798
          %v831 = vpack.c.b16 %v803, %v801
          %v832 = vpack.c.b16 %v804, %v802
          %v833 = vpack.c.b16 %v807, %v805
          %v834 = vpack.c.b16 %v808, %v806
          %v835 = vpack.c.b16 %v811, %v809
          %v836 = vpack.c.b16 %v812, %v810
          %v837 = vpack.c.b16 %v815, %v813
          %v838 = vpack.c.b16 %v816, %v814
          %v839 = vpack.c.b16 %v819, %v817
          %v840 = vpack.c.b16 %v820, %v818
          %v841 = vpack.c.b16 %v823, %v821
          %v842 = vpack.c.b16 %v824, %v822
          %v843 = vpack.c.b16 %v827, %v825
          %v844 = vpack.c.b16 %v828, %v826
          %861 = vmatprep.subr.bf16.mxu0 %v830
          %862 = vmatpush1.bf16.msra.mxu0 %v829
          %863 = vmatprep.subr.bf16.mxu0 %v832
          %864 = vmatpush1.bf16.msra.mxu0 %v831
          %865 = vmatprep.subr.bf16.mxu0 %v834
          %866 = vmatpush1.bf16.msra.mxu0 %v833
          %867 = vmatprep.subr.bf16.mxu0 %v836
          %868 = vmatpush1.bf16.msra.mxu0 %v835
          %869 = vmatprep.subr.bf16.mxu0 %v838
          %870 = vmatpush1.bf16.msra.mxu0 %v837
          %871 = vmatprep.subr.bf16.mxu0 %v840
          %872 = vmatpush1.bf16.msra.mxu0 %v839
          %873 = vmatprep.subr.bf16.mxu0 %v842
          %874 = vmatpush1.bf16.msra.mxu0 %v841
          %875 = vmatprep.subr.bf16.mxu0 %v844
          %876 = vmatpush1.bf16.msra.mxu0 %v843
          %877 = vmatprep.subr.bf16.mxu0 0
          %878 = vmatpush1.bf16.msra.mxu0 0
          %879 = vmatprep.subr.bf16.mxu0 0
          %880 = vmatpush1.bf16.msra.mxu0 0
          %881 = vmatprep.subr.bf16.mxu0 0
          %882 = vmatpush1.bf16.msra.mxu0 0
          %883 = vmatprep.subr.bf16.mxu0 0
          %884 = vmatpush1.bf16.msra.mxu0 0
          %885 = vmatprep.subr.bf16.mxu0 0
          %886 = vmatpush1.bf16.msra.mxu0 0
          %887 = vmatprep.subr.bf16.mxu0 0
          %888 = vmatpush1.bf16.msra.mxu0 0
          %889 = vmatprep.subr.bf16.mxu0 0
          %890 = vmatpush1.bf16.msra.mxu0 0
          %891 = vmatprep.subr.bf16.mxu0 0
          %892 = vmatpush1.bf16.msra.mxu0 0
          %893 = vmatprep.mubr.bf16.mxu0 0
          %894 = vmatmul.mubr.bf16.gmra.mrb[0].mxu0 %v749
          %v895 = vpop.f32.mrb[0].mxu0
          %v896 = vadd.f32 %v678, %v895
          %v897 = vpop.f32.mrb[0].mxu0
          %v898 = vadd.f32 %v682, %v897
          %v899 = vpop.f32.mrb[0].mxu0
          %v900 = vadd.f32 %v678, %v899
          %v901 = vpop.f32.mrb[0].mxu0
          %v902 = vadd.f32 %v682, %v901
          %903 = vmatprep.mubr.bf16.mxu0 0
          %904 = vmatmul.mubr.bf16.gmra.mrb[0].mxu0 %v750
          %v905 = vpop.f32.mrb[0].mxu0
          %v906 = vadd.f32 %v678, %v905
          %v907 = vpop.f32.mrb[0].mxu0
          %v908 = vadd.f32 %v682, %v907
          %v909 = vpop.f32.mrb[0].mxu0
          %v910 = vadd.f32 %v678, %v909
          %v911 = vpop.f32.mrb[0].mxu0
          %v912 = vadd.f32 %v682, %v911
          %913 = vmatprep.mubr.bf16.mxu0 0
          %914 = vmatmul.mubr.bf16.gmra.mrb[0].mxu0 %v751
          %v915 = vpop.f32.mrb[0].mxu0
          %v916 = vadd.f32 %v678, %v915
          %v917 = vpop.f32.mrb[0].mxu0
          %v918 = vadd.f32 %v682, %v917
          %v919 = vpop.f32.mrb[0].mxu0
          %v920 = vadd.f32 %v678, %v919
          %v921 = vpop.f32.mrb[0].mxu0
          %v922 = vadd.f32 %v682, %v921
          %923 = vmatprep.mubr.bf16.mxu0 0
          %924 = vmatmul.mubr.bf16.gmra.mrb[0].mxu0 %v752
          %v925 = vpop.f32.mrb[0].mxu0
          %v926 = vadd.f32 %v678, %v925
          %v927 = vpop.f32.mrb[0].mxu0
          %v928 = vadd.f32 %v682, %v927
          %v929 = vpop.f32.mrb[0].mxu0
          %v930 = vadd.f32 %v678, %v929
          %v931 = vpop.f32.mrb[0].mxu0
          %v932 = vadd.f32 %v682, %v931
          %933 = vmatprep.mubr.bf16.mxu0 0
          %934 = vmatmul.mubr.bf16.gmra.mrb[0].mxu0 %v753
          %v935 = vpop.f32.mrb[0].mxu0
          %v936 = vadd.f32 %v678, %v935
          %v937 = vpop.f32.mrb[0].mxu0
          %v938 = vadd.f32 %v682, %v937
          %v939 = vpop.f32.mrb[0].mxu0
          %v940 = vadd.f32 %v678, %v939
          %v941 = vpop.f32.mrb[0].mxu0
          %v942 = vadd.f32 %v682, %v941
          %943 = vmatprep.mubr.bf16.mxu0 0
          %944 = vmatmul.mubr.bf16.gmra.mrb[0].mxu0 %v754
          %v945 = vpop.f32.mrb[0].mxu0
          %v946 = vadd.f32 %v678, %v945
          %v947 = vpop.f32.mrb[0].mxu0
          %v948 = vadd.f32 %v682, %v947
          %v949 = vpop.f32.mrb[0].mxu0
          %v950 = vadd.f32 %v678, %v949
          %v951 = vpop.f32.mrb[0].mxu0
          %v952 = vadd.f32 %v682, %v951
          %953 = vmatprep.mubr.bf16.mxu0 0
          %954 = vmatmul.mubr.bf16.gmra.mrb[0].mxu0 %v755
          %v955 = vpop.f32.mrb[0].mxu0
          %v956 = vadd.f32 %v678, %v955
          %v957 = vpop.f32.mrb[0].mxu0
          %v958 = vadd.f32 %v682, %v957
          %v959 = vpop.f32.mrb[0].mxu0
          %v960 = vadd.f32 %v678, %v959
          %v961 = vpop.f32.mrb[0].mxu0
          %v962 = vadd.f32 %v682, %v961
          %963 = vmatprep.mubr.bf16.mxu0 0
          %964 = vmatmul.mubr.bf16.gmra.mrb[0].mxu0 %v756
          %v965 = vpop.f32.mrb[0].mxu0
          %v966 = vadd.f32 %v678, %v965
          %v967 = vpop.f32.mrb[0].mxu0
          %v968 = vadd.f32 %v682, %v967
          %v969 = vpop.f32.mrb[0].mxu0
          %v970 = vadd.f32 %v678, %v969
          %v971 = vpop.f32.mrb[0].mxu0
          %v972 = vadd.f32 %v682, %v971
          %973 = vmatprep.mubr.bf16.mxu0 0
          %974 = vmatmul.mubr.bf16.gmra.mrb[0].mxu0 %v757
          %v975 = vpop.f32.mrb[0].mxu0
          %v976 = vadd.f32 %v678, %v975
          %v977 = vpop.f32.mrb[0].mxu0
          %v978 = vadd.f32 %v682, %v977
          %v979 = vpop.f32.mrb[0].mxu0
          %v980 = vadd.f32 %v678, %v979
          %v981 = vpop.f32.mrb[0].mxu0
          %v982 = vadd.f32 %v682, %v981
          %983 = vmatprep.mubr.bf16.mxu0 0
          %984 = vmatmul.mubr.bf16.gmra.mrb[0].mxu0 %v758
          %v985 = vpop.f32.mrb[0].mxu0
          %v986 = vadd.f32 %v678, %v985
          %v987 = vpop.f32.mrb[0].mxu0
          %v988 = vadd.f32 %v682, %v987
          %v989 = vpop.f32.mrb[0].mxu0
          %v990 = vadd.f32 %v678, %v989
          %v991 = vpop.f32.mrb[0].mxu0
          %v992 = vadd.f32 %v682, %v991
          %993 = vmatprep.mubr.bf16.mxu0 0
          %994 = vmatmul.mubr.bf16.gmra.mrb[0].mxu0 %v759
          %v995 = vpop.f32.mrb[0].mxu0
          %v996 = vadd.f32 %v678, %v995
          %v997 = vpop.f32.mrb[0].mxu0
          %v998 = vadd.f32 %v682, %v997
          %v999 = vpop.f32.mrb[0].mxu0
          %v1000 = vadd.f32 %v678, %v999
          %v1001 = vpop.f32.mrb[0].mxu0
          %v1002 = vadd.f32 %v682, %v1001
          %1003 = vmatprep.mubr.bf16.mxu0 0
          %1004 = vmatmul.mubr.bf16.gmra.mrb[0].mxu0 %v760
          %v1005 = vpop.f32.mrb[0].mxu0
          %v1006 = vadd.f32 %v678, %v1005
          %v1007 = vpop.f32.mrb[0].mxu0
          %v1008 = vadd.f32 %v682, %v1007
          %v1009 = vpop.f32.mrb[0].mxu0
          %v1010 = vadd.f32 %v678, %v1009
          %v1011 = vpop.f32.mrb[0].mxu0
          %v1012 = vadd.f32 %v682, %v1011
          %1013 = vmatprep.mubr.bf16.mxu0 0
          %1014 = vmatmul.mubr.bf16.gmra.mrb[0].mxu0 %v761
          %v1015 = vpop.f32.mrb[0].mxu0
          %v1016 = vadd.f32 %v678, %v1015
          %v1017 = vpop.f32.mrb[0].mxu0
          %v1018 = vadd.f32 %v682, %v1017
          %v1019 = vpop.f32.mrb[0].mxu0
          %v1020 = vadd.f32 %v678, %v1019
          %v1021 = vpop.f32.mrb[0].mxu0
          %v1022 = vadd.f32 %v682, %v1021
          %1023 = vmatprep.mubr.bf16.mxu0 0
          %1024 = vmatmul.mubr.bf16.gmra.mrb[0].mxu0 %v762
          %v1025 = vpop.f32.mrb[0].mxu0
          %v1026 = vadd.f32 %v678, %v1025
          %v1027 = vpop.f32.mrb[0].mxu0
          %v1028 = vadd.f32 %v682, %v1027
          %v1029 = vpop.f32.mrb[0].mxu0
          %v1030 = vadd.f32 %v678, %v1029
          %v1031 = vpop.f32.mrb[0].mxu0
          %v1032 = vadd.f32 %v682, %v1031
          %1033 = vmatprep.mubr.bf16.mxu0 0
          %1034 = vmatmul.mubr.bf16.gmra.mrb[0].mxu0 %v763
          %v1035 = vpop.f32.mrb[0].mxu0
          %v1036 = vadd.f32 %v678, %v1035
          %v1037 = vpop.f32.mrb[0].mxu0
          %v1038 = vadd.f32 %v682, %v1037
          %v1039 = vpop.f32.mrb[0].mxu0
          %v1040 = vadd.f32 %v678, %v1039
          %v1041 = vpop.f32.mrb[0].mxu0
          %v1042 = vadd.f32 %v682, %v1041
          %1043 = vmatprep.mubr.bf16.mxu0 0
          %1044 = vmatmul.mubr.bf16.gmra.mrb[0].mxu0 %v764
          %v1045 = vpop.f32.mrb[0].mxu0
          %v1046 = vadd.f32 %v678, %v1045
          %v1047 = vpop.f32.mrb[0].mxu0
          %v1048 = vadd.f32 %v682, %v1047
          %v1049 = vpop.f32.mrb[0].mxu0
          %v1050 = vadd.f32 %v678, %v1049
          %v1051 = vpop.f32.mrb[0].mxu0
          %v1052 = vadd.f32 %v682, %v1051
          %1053 = vdwg.mxu0
          %v1054 = vxor.u32 %v896, 2147483648
          %v1055 = vxor.u32 %v900, 2147483648
          %v1056 = vxor.u32 %v906, 2147483648
          %v1057 = vxor.u32 %v910, 2147483648
          %v1058 = vxor.u32 %v916, 2147483648
          %v1059 = vxor.u32 %v920, 2147483648
          %v1060 = vxor.u32 %v926, 2147483648
          %v1061 = vxor.u32 %v930, 2147483648
          %v1062 = vxor.u32 %v936, 2147483648
          %v1063 = vxor.u32 %v940, 2147483648
          %v1064 = vxor.u32 %v946, 2147483648
          %v1065 = vxor.u32 %v950, 2147483648
          %v1066 = vxor.u32 %v956, 2147483648
          %v1067 = vxor.u32 %v960, 2147483648
          %v1068 = vxor.u32 %v966, 2147483648
          %v1069 = vxor.u32 %v970, 2147483648
          %v1070 = vxor.u32 %v976, 2147483648
          %v1071 = vxor.u32 %v980, 2147483648
          %v1072 = vxor.u32 %v986, 2147483648
          %v1073 = vxor.u32 %v990, 2147483648
          %v1074 = vxor.u32 %v996, 2147483648
          %v1075 = vxor.u32 %v1000, 2147483648
          %v1076 = vxor.u32 %v1006, 2147483648
          %v1077 = vxor.u32 %v1010, 2147483648
          %v1078 = vxor.u32 %v1016, 2147483648
          %v1079 = vxor.u32 %v1020, 2147483648
          %v1080 = vxor.u32 %v1026, 2147483648
          %v1081 = vxor.u32 %v1030, 2147483648
          %v1082 = vxor.u32 %v1036, 2147483648
          %v1083 = vxor.u32 %v1040, 2147483648
          %v1084 = vxor.u32 %v1046, 2147483648
          %v1085 = vxor.u32 %v1050, 2147483648
          %v1086 = vmul.f32 %v1054, 1.442695
          %v1087 = vpow.pop %v1086
          %v1088 = vmul.f32 %v1055, 1.442695
          %v1089 = vpow.pop %v1088
          %v1090 = vmul.f32 %v1056, 1.442695
          %v1091 = vpow.pop %v1090
          %v1092 = vmul.f32 %v1057, 1.442695
          %v1093 = vpow.pop %v1092
          %v1094 = vmul.f32 %v1058, 1.442695
          %v1095 = vpow.pop %v1094
          %v1096 = vmul.f32 %v1059, 1.442695
          %v1097 = vpow.pop %v1096
          %v1098 = vmul.f32 %v1060, 1.442695
          %v1099 = vpow.pop %v1098
          %v1100 = vmul.f32 %v1061, 1.442695
          %v1101 = vpow.pop %v1100
          %v1102 = vmul.f32 %v1062, 1.442695
          %v1103 = vpow.pop %v1102
          %v1104 = vmul.f32 %v1063, 1.442695
          %v1105 = vpow.pop %v1104
          %v1106 = vmul.f32 %v1064, 1.442695
          %v1107 = vpow.pop %v1106
          %v1108 = vmul.f32 %v1065, 1.442695
          %v1109 = vpow.pop %v1108
          %v1110 = vmul.f32 %v1066, 1.442695
          %v1111 = vpow.pop %v1110
          %v1112 = vmul.f32 %v1067, 1.442695
          %v1113 = vpow.pop %v1112
          %v1114 = vmul.f32 %v1068, 1.442695
          %v1115 = vpow.pop %v1114
          %v1116 = vmul.f32 %v1069, 1.442695
          %v1117 = vpow.pop %v1116
          %v1118 = vmul.f32 %v1070, 1.442695
          %v1119 = vpow.pop %v1118
          %v1120 = vmul.f32 %v1071, 1.442695
          %v1121 = vpow.pop %v1120
          %v1122 = vmul.f32 %v1072, 1.442695
          %v1123 = vpow.pop %v1122
          %v1124 = vmul.f32 %v1073, 1.442695
          %v1125 = vpow.pop %v1124
          %v1126 = vmul.f32 %v1074, 1.442695
          %v1127 = vpow.pop %v1126
          %v1128 = vmul.f32 %v1075, 1.442695
          %v1129 = vpow.pop %v1128
          %v1130 = vmul.f32 %v1076, 1.442695
          %v1131 = vpow.pop %v1130
          %v1132 = vmul.f32 %v1077, 1.442695
          %v1133 = vpow.pop %v1132
          %v1134 = vmul.f32 %v1078, 1.442695
          %v1135 = vpow.pop %v1134
          %v1136 = vmul.f32 %v1079, 1.442695
          %v1137 = vpow.pop %v1136
          %v1138 = vmul.f32 %v1080, 1.442695
          %v1139 = vpow.pop %v1138
          %v1140 = vmul.f32 %v1081, 1.442695
          %v1141 = vpow.pop %v1140
          %v1142 = vmul.f32 %v1082, 1.442695
          %v1143 = vpow.pop %v1142
          %v1144 = vmul.f32 %v1083, 1.442695
          %v1145 = vpow.pop %v1144
          %v1146 = vmul.f32 %v1084, 1.442695
          %v1147 = vpow.pop %v1146
          %v1148 = vmul.f32 %v1085, 1.442695
          %v1149 = vpow.pop %v1148
          %v1150 = vadd.f32 %v1087, 1.0
          %v1151 = vadd.f32 %v1089, 1.0
          %v1152 = vadd.f32 %v1091, 1.0
          %v1153 = vadd.f32 %v1093, 1.0
          %v1154 = vadd.f32 %v1095, 1.0
          %v1155 = vadd.f32 %v1097, 1.0
          %v1156 = vadd.f32 %v1099, 1.0
          %v1157 = vadd.f32 %v1101, 1.0
          %v1158 = vadd.f32 %v1103, 1.0
          %v1159 = vadd.f32 %v1105, 1.0
          %v1160 = vadd.f32 %v1107, 1.0
          %v1161 = vadd.f32 %v1109, 1.0
          %v1162 = vadd.f32 %v1111, 1.0
          %v1163 = vadd.f32 %v1113, 1.0
          %v1164 = vadd.f32 %v1115, 1.0
          %v1165 = vadd.f32 %v1117, 1.0
          %v1166 = vadd.f32 %v1119, 1.0
          %v1167 = vadd.f32 %v1121, 1.0
          %v1168 = vadd.f32 %v1123, 1.0
          %v1169 = vadd.f32 %v1125, 1.0
          %v1170 = vadd.f32 %v1127, 1.0
          %v1171 = vadd.f32 %v1129, 1.0
          %v1172 = vadd.f32 %v1131, 1.0
          %v1173 = vadd.f32 %v1133, 1.0
          %v1174 = vadd.f32 %v1135, 1.0
          %v1175 = vadd.f32 %v1137, 1.0
          %v1176 = vadd.f32 %v1139, 1.0
          %v1177 = vadd.f32 %v1141, 1.0
          %v1178 = vadd.f32 %v1143, 1.0
          %v1179 = vadd.f32 %v1145, 1.0
          %v1180 = vadd.f32 %v1147, 1.0
          %v1181 = vadd.f32 %v1149, 1.0
          %v1182 = vrcp.pop %v1150
          %v1183 = vmul.f32 1.0, %v1182
          %v1184 = vrcp.pop %v1151
          %v1185 = vmul.f32 1.0, %v1184
          %v1186 = vrcp.pop %v1152
          %v1187 = vmul.f32 1.0, %v1186
          %v1188 = vrcp.pop %v1153
          %v1189 = vmul.f32 1.0, %v1188
          %v1190 = vrcp.pop %v1154
          %v1191 = vmul.f32 1.0, %v1190
          %v1192 = vrcp.pop %v1155
          %v1193 = vmul.f32 1.0, %v1192
          %v1194 = vrcp.pop %v1156
          %v1195 = vmul.f32 1.0, %v1194
          %v1196 = vrcp.pop %v1157
          %v1197 = vmul.f32 1.0, %v1196
          %v1198 = vrcp.pop %v1158
          %v1199 = vmul.f32 1.0, %v1198
          %v1200 = vrcp.pop %v1159
          %v1201 = vmul.f32 1.0, %v1200
          %v1202 = vrcp.pop %v1160
          %v1203 = vmul.f32 1.0, %v1202
          %v1204 = vrcp.pop %v1161
          %v1205 = vmul.f32 1.0, %v1204
          %v1206 = vrcp.pop %v1162
          %v1207 = vmul.f32 1.0, %v1206
          %v1208 = vrcp.pop %v1163
          %v1209 = vmul.f32 1.0, %v1208
          %v1210 = vrcp.pop %v1164
          %v1211 = vmul.f32 1.0, %v1210
          %v1212 = vrcp.pop %v1165
          %v1213 = vmul.f32 1.0, %v1212
          %v1214 = vrcp.pop %v1166
          %v1215 = vmul.f32 1.0, %v1214
          %v1216 = vrcp.pop %v1167
          %v1217 = vmul.f32 1.0, %v1216
          %v1218 = vrcp.pop %v1168
          %v1219 = vmul.f32 1.0, %v1218
          %v1220 = vrcp.pop %v1169
          %v1221 = vmul.f32 1.0, %v1220
          %v1222 = vrcp.pop %v1170
          %v1223 = vmul.f32 1.0, %v1222
          %v1224 = vrcp.pop %v1171
          %v1225 = vmul.f32 1.0, %v1224
          %v1226 = vrcp.pop %v1172
          %v1227 = vmul.f32 1.0, %v1226
          %v1228 = vrcp.pop %v1173
          %v1229 = vmul.f32 1.0, %v1228
          %v1230 = vrcp.pop %v1174
          %v1231 = vmul.f32 1.0, %v1230
          %v1232 = vrcp.pop %v1175
          %v1233 = vmul.f32 1.0, %v1232
          %v1234 = vrcp.pop %v1176
          %v1235 = vmul.f32 1.0, %v1234
          %v1236 = vrcp.pop %v1177
          %v1237 = vmul.f32 1.0, %v1236
          %v1238 = vrcp.pop %v1178
          %v1239 = vmul.f32 1.0, %v1238
          %v1240 = vrcp.pop %v1179
          %v1241 = vmul.f32 1.0, %v1240
          %v1242 = vrcp.pop %v1180
          %v1243 = vmul.f32 1.0, %v1242
          %v1244 = vrcp.pop %v1181
          %v1245 = vmul.f32 1.0, %v1244
          %v1246 = vmul.f32 %v896, %v1183
          %v1247 = vmul.f32 %v900, %v1185
          %v1248 = vmul.f32 %v906, %v1187
          %v1249 = vmul.f32 %v910, %v1189
          %v1250 = vmul.f32 %v916, %v1191
          %v1251 = vmul.f32 %v920, %v1193
          %v1252 = vmul.f32 %v926, %v1195
          %v1253 = vmul.f32 %v930, %v1197
          %v1254 = vmul.f32 %v936, %v1199
          %v1255 = vmul.f32 %v940, %v1201
          %v1256 = vmul.f32 %v946, %v1203
          %v1257 = vmul.f32 %v950, %v1205
          %v1258 = vmul.f32 %v956, %v1207
          %v1259 = vmul.f32 %v960, %v1209
          %v1260 = vmul.f32 %v966, %v1211
          %v1261 = vmul.f32 %v970, %v1213
          %v1262 = vmul.f32 %v976, %v1215
          %v1263 = vmul.f32 %v980, %v1217
          %v1264 = vmul.f32 %v986, %v1219
          %v1265 = vmul.f32 %v990, %v1221
          %v1266 = vmul.f32 %v996, %v1223
          %v1267 = vmul.f32 %v1000, %v1225
          %v1268 = vmul.f32 %v1006, %v1227
          %v1269 = vmul.f32 %v1010, %v1229
          %v1270 = vmul.f32 %v1016, %v1231
          %v1271 = vmul.f32 %v1020, %v1233
          %v1272 = vmul.f32 %v1026, %v1235
          %v1273 = vmul.f32 %v1030, %v1237
          %v1274 = vmul.f32 %v1036, %v1239
          %v1275 = vmul.f32 %v1040, %v1241
          %v1276 = vmul.f32 %v1046, %v1243
          %v1277 = vmul.f32 %v1050, %v1245
          %v1278 = vmul.f32 %v1246, %v898
          %v1279 = vmul.f32 %v1247, %v902
          %v1280 = vmul.f32 %v1248, %v908
          %v1281 = vmul.f32 %v1249, %v912
          %v1282 = vmul.f32 %v1250, %v918
          %v1283 = vmul.f32 %v1251, %v922
          %v1284 = vmul.f32 %v1252, %v928
          %v1285 = vmul.f32 %v1253, %v932
          %v1286 = vmul.f32 %v1254, %v938
          %v1287 = vmul.f32 %v1255, %v942
          %v1288 = vmul.f32 %v1256, %v948
          %v1289 = vmul.f32 %v1257, %v952
          %v1290 = vmul.f32 %v1258, %v958
          %v1291 = vmul.f32 %v1259, %v962
          %v1292 = vmul.f32 %v1260, %v968
          %v1293 = vmul.f32 %v1261, %v972
          %v1294 = vmul.f32 %v1262, %v978
          %v1295 = vmul.f32 %v1263, %v982
          %v1296 = vmul.f32 %v1264, %v988
          %v1297 = vmul.f32 %v1265, %v992
          %v1298 = vmul.f32 %v1266, %v998
          %v1299 = vmul.f32 %v1267, %v1002
          %v1300 = vmul.f32 %v1268, %v1008
          %v1301 = vmul.f32 %v1269, %v1012
          %v1302 = vmul.f32 %v1270, %v1018
          %v1303 = vmul.f32 %v1271, %v1022
          %v1304 = vmul.f32 %v1272, %v1028
          %v1305 = vmul.f32 %v1273, %v1032
          %v1306 = vmul.f32 %v1274, %v1038
          %v1307 = vmul.f32 %v1275, %v1042
          %v1308 = vmul.f32 %v1276, %v1048
          %v1309 = vmul.f32 %v1277, %v1052
          %v1310 = vpack.c.bf16 %v1279, %v1278
          %v1311 = vpack.c.bf16 %v1281, %v1280
          %v1312 = vpack.c.bf16 %v1283, %v1282
          %v1313 = vpack.c.bf16 %v1285, %v1284
          %v1314 = vpack.c.bf16 %v1287, %v1286
          %v1315 = vpack.c.bf16 %v1289, %v1288
          %v1316 = vpack.c.bf16 %v1291, %v1290
          %v1317 = vpack.c.bf16 %v1293, %v1292
          %v1318 = vpack.c.bf16 %v1295, %v1294
          %v1319 = vpack.c.bf16 %v1297, %v1296
          %v1320 = vpack.c.bf16 %v1299, %v1298
          %v1321 = vpack.c.bf16 %v1301, %v1300
          %v1322 = vpack.c.bf16 %v1303, %v1302
          %v1323 = vpack.c.bf16 %v1305, %v1304
          %v1324 = vpack.c.bf16 %v1307, %v1306
          %v1325 = vpack.c.bf16 %v1309, %v1308
          %v1326 = vld [vmem:[%s543] sm:$0xf]
          %v1327 = vld [vmem:[%s543 + $0x4] sm:$0xf]
          %v1328 = vld [vmem:[%s543 + $0x8] sm:$0xf]
          %v1329 = vld [vmem:[%s543 + $0xc] sm:$0xf]
          %v1330 = vld [vmem:[%s543 + $0x10] sm:$0xf]
          %v1331 = vld [vmem:[%s543 + $0x14] sm:$0xf]
          %v1332 = vld [vmem:[%s543 + $0x18] sm:$0xf]
          %v1333 = vld [vmem:[%s543 + $0x1c] sm:$0xf]
          %v1334 = vld [vmem:[%s543 + $0x20] sm:$0xf]
          %v1335 = vld [vmem:[%s543 + $0x24] sm:$0xf]
          %v1336 = vld [vmem:[%s543 + $0x28] sm:$0xf]
          %v1337 = vld [vmem:[%s543 + $0x2c] sm:$0xf]
          %v1338 = vld [vmem:[%s543 + $0x30] sm:$0xf]
          %v1339 = vld [vmem:[%s543 + $0x34] sm:$0xf]
          %v1340 = vld [vmem:[%s543 + $0x38] sm:$0xf]
          %v1341 = vld [vmem:[%s543 + $0x3c] sm:$0xf]
          %v1358 = vunpack.c.l.b16 %v1326
          %v1359 = vunpack.c.l.b16 %v1327
          %v1360 = vunpack.c.l.b16 %v1328
          %v1361 = vunpack.c.l.b16 %v1329
          %v1362 = vunpack.c.l.b16 %v1330
          %v1363 = vunpack.c.l.b16 %v1331
          %v1364 = vunpack.c.l.b16 %v1332
          %v1365 = vunpack.c.l.b16 %v1333
          %v1366 = vunpack.c.l.b16 %v1334
          %v1367 = vunpack.c.l.b16 %v1335
          %v1368 = vunpack.c.l.b16 %v1336
          %v1369 = vunpack.c.l.b16 %v1337
          %v1370 = vunpack.c.l.b16 %v1338
          %v1371 = vunpack.c.l.b16 %v1339
          %v1372 = vunpack.c.l.b16 %v1340
          %v1373 = vunpack.c.l.b16 %v1341
          %v1374 = vpack.c.b16 %v1359, %v1358
          %v1375 = vpack.c.b16 %v1361, %v1360
          %v1376 = vpack.c.b16 %v1363, %v1362
          %v1377 = vpack.c.b16 %v1365, %v1364
          %v1378 = vpack.c.b16 %v1367, %v1366
          %v1379 = vpack.c.b16 %v1369, %v1368
          %v1380 = vpack.c.b16 %v1371, %v1370
          %v1381 = vpack.c.b16 %v1373, %v1372
          %1390 = vmatprep.subr.bf16.mxu0 0
          %1391 = vmatpush1.bf16.msra.mxu0 %v1374
          %1392 = vmatprep.subr.bf16.mxu0 0
          %1393 = vmatpush1.bf16.msra.mxu0 %v1375
          %1394 = vmatprep.subr.bf16.mxu0 0
          %1395 = vmatpush1.bf16.msra.mxu0 %v1376
          %1396 = vmatprep.subr.bf16.mxu0 0
          %1397 = vmatpush1.bf16.msra.mxu0 %v1377
          %1398 = vmatprep.subr.bf16.mxu0 0
          %1399 = vmatpush1.bf16.msra.mxu0 %v1378
          %1400 = vmatprep.subr.bf16.mxu0 0
          %1401 = vmatpush1.bf16.msra.mxu0 %v1379
          %1402 = vmatprep.subr.bf16.mxu0 0
          %1403 = vmatpush1.bf16.msra.mxu0 %v1380
          %1404 = vmatprep.subr.bf16.mxu0 0
          %1405 = vmatpush1.bf16.msra.mxu0 %v1381
          %1406 = vmatprep.subr.bf16.mxu0 0
          %1407 = vmatpush1.bf16.msra.mxu0 0
          %1408 = vmatprep.subr.bf16.mxu0 0
          %1409 = vmatpush1.bf16.msra.mxu0 0
          %1410 = vmatprep.subr.bf16.mxu0 0
          %1411 = vmatpush1.bf16.msra.mxu0 0
          %1412 = vmatprep.subr.bf16.mxu0 0
          %1413 = vmatpush1.bf16.msra.mxu0 0
          %1414 = vmatprep.subr.bf16.mxu0 0
          %1415 = vmatpush1.bf16.msra.mxu0 0
          %1416 = vmatprep.subr.bf16.mxu0 0
          %1417 = vmatpush1.bf16.msra.mxu0 0
          %1418 = vmatprep.subr.bf16.mxu0 0
          %1419 = vmatpush1.bf16.msra.mxu0 0
          %1420 = vmatprep.subr.bf16.mxu0 0
          %1421 = vmatpush1.bf16.msra.mxu0 0
          %1422 = vmatprep.mubr.bf16.mxu0 0
          %1423 = vmatmul.mubr.bf16.gmra.mrb[0].mxu0 %v1310
          %v1424 = vpop.f32.mrb[0].mxu0
          %v1425 = vadd.f32 0.0, %v1424
          %v1426 = vpop.f32.mrb[0].mxu0
          %v1427 = vpop.f32.mrb[0].mxu0
          %v1428 = vadd.f32 0.0, %v1427
          %v1429 = vpop.f32.mrb[0].mxu0
          %1430 = vmatprep.mubr.bf16.mxu0 0
          %1431 = vmatmul.mubr.bf16.gmra.mrb[0].mxu0 %v1311
          %v1432 = vpop.f32.mrb[0].mxu0
          %v1433 = vadd.f32 0.0, %v1432
          %v1434 = vpop.f32.mrb[0].mxu0
          %v1435 = vpop.f32.mrb[0].mxu0
          %v1436 = vadd.f32 0.0, %v1435
          %v1437 = vpop.f32.mrb[0].mxu0
          %1438 = vmatprep.mubr.bf16.mxu0 0
          %1439 = vmatmul.mubr.bf16.gmra.mrb[0].mxu0 %v1312
          %v1440 = vpop.f32.mrb[0].mxu0
          %v1441 = vadd.f32 0.0, %v1440
          %v1442 = vpop.f32.mrb[0].mxu0
          %v1443 = vpop.f32.mrb[0].mxu0
          %v1444 = vadd.f32 0.0, %v1443
          %v1445 = vpop.f32.mrb[0].mxu0
          %1446 = vmatprep.mubr.bf16.mxu0 0
          %1447 = vmatmul.mubr.bf16.gmra.mrb[0].mxu0 %v1313
          %v1448 = vpop.f32.mrb[0].mxu0
          %v1449 = vadd.f32 0.0, %v1448
          %v1450 = vpop.f32.mrb[0].mxu0
          %v1451 = vpop.f32.mrb[0].mxu0
          %v1452 = vadd.f32 0.0, %v1451
          %v1453 = vpop.f32.mrb[0].mxu0
          %1454 = vmatprep.mubr.bf16.mxu0 0
          %1455 = vmatmul.mubr.bf16.gmra.mrb[0].mxu0 %v1314
          %v1456 = vpop.f32.mrb[0].mxu0
          %v1457 = vadd.f32 0.0, %v1456
          %v1458 = vpop.f32.mrb[0].mxu0
          %v1459 = vpop.f32.mrb[0].mxu0
          %v1460 = vadd.f32 0.0, %v1459
          %v1461 = vpop.f32.mrb[0].mxu0
          %1462 = vmatprep.mubr.bf16.mxu0 0
          %1463 = vmatmul.mubr.bf16.gmra.mrb[0].mxu0 %v1315
          %v1464 = vpop.f32.mrb[0].mxu0
          %v1465 = vadd.f32 0.0, %v1464
          %v1466 = vpop.f32.mrb[0].mxu0
          %v1467 = vpop.f32.mrb[0].mxu0
          %v1468 = vadd.f32 0.0, %v1467
          %v1469 = vpop.f32.mrb[0].mxu0
          %1470 = vmatprep.mubr.bf16.mxu0 0
          %1471 = vmatmul.mubr.bf16.gmra.mrb[0].mxu0 %v1316
          %v1472 = vpop.f32.mrb[0].mxu0
          %v1473 = vadd.f32 0.0, %v1472
          %v1474 = vpop.f32.mrb[0].mxu0
          %v1475 = vpop.f32.mrb[0].mxu0
          %v1476 = vadd.f32 0.0, %v1475
          %v1477 = vpop.f32.mrb[0].mxu0
          %1478 = vmatprep.mubr.bf16.mxu0 0
          %1479 = vmatmul.mubr.bf16.gmra.mrb[0].mxu0 %v1317
          %v1480 = vpop.f32.mrb[0].mxu0
          %v1481 = vadd.f32 0.0, %v1480
          %v1482 = vpop.f32.mrb[0].mxu0
          %v1483 = vpop.f32.mrb[0].mxu0
          %v1484 = vadd.f32 0.0, %v1483
          %v1485 = vpop.f32.mrb[0].mxu0
          %1486 = vmatprep.mubr.bf16.mxu0 0
          %1487 = vmatmul.mubr.bf16.gmra.mrb[0].mxu0 %v1318
          %v1488 = vpop.f32.mrb[0].mxu0
          %v1489 = vadd.f32 0.0, %v1488
          %v1490 = vpop.f32.mrb[0].mxu0
          %v1491 = vpop.f32.mrb[0].mxu0
          %v1492 = vadd.f32 0.0, %v1491
          %v1493 = vpop.f32.mrb[0].mxu0
          %1494 = vmatprep.mubr.bf16.mxu0 0
          %1495 = vmatmul.mubr.bf16.gmra.mrb[0].mxu0 %v1319
          %v1496 = vpop.f32.mrb[0].mxu0
          %v1497 = vadd.f32 0.0, %v1496
          %v1498 = vpop.f32.mrb[0].mxu0
          %v1499 = vpop.f32.mrb[0].mxu0
          %v1500 = vadd.f32 0.0, %v1499
          %v1501 = vpop.f32.mrb[0].mxu0
          %1502 = vmatprep.mubr.bf16.mxu0 0
          %1503 = vmatmul.mubr.bf16.gmra.mrb[0].mxu0 %v1320
          %v1504 = vpop.f32.mrb[0].mxu0
          %v1505 = vadd.f32 0.0, %v1504
          %v1506 = vpop.f32.mrb[0].mxu0
          %v1507 = vpop.f32.mrb[0].mxu0
          %v1508 = vadd.f32 0.0, %v1507
          %v1509 = vpop.f32.mrb[0].mxu0
          %1510 = vmatprep.mubr.bf16.mxu0 0
          %1511 = vmatmul.mubr.bf16.gmra.mrb[0].mxu0 %v1321
          %v1512 = vpop.f32.mrb[0].mxu0
          %v1513 = vadd.f32 0.0, %v1512
          %v1514 = vpop.f32.mrb[0].mxu0
          %v1515 = vpop.f32.mrb[0].mxu0
          %v1516 = vadd.f32 0.0, %v1515
          %v1517 = vpop.f32.mrb[0].mxu0
          %1518 = vmatprep.mubr.bf16.mxu0 0
          %1519 = vmatmul.mubr.bf16.gmra.mrb[0].mxu0 %v1322
          %v1520 = vpop.f32.mrb[0].mxu0
          %v1521 = vadd.f32 0.0, %v1520
          %v1522 = vpop.f32.mrb[0].mxu0
          %v1523 = vpop.f32.mrb[0].mxu0
          %v1524 = vadd.f32 0.0, %v1523
          %v1525 = vpop.f32.mrb[0].mxu0
          %1526 = vmatprep.mubr.bf16.mxu0 0
          %1527 = vmatmul.mubr.bf16.gmra.mrb[0].mxu0 %v1323
          %v1528 = vpop.f32.mrb[0].mxu0
          %v1529 = vadd.f32 0.0, %v1528
          %v1530 = vpop.f32.mrb[0].mxu0
          %v1531 = vpop.f32.mrb[0].mxu0
          %v1532 = vadd.f32 0.0, %v1531
          %v1533 = vpop.f32.mrb[0].mxu0
          %1534 = vmatprep.mubr.bf16.mxu0 0
          %1535 = vmatmul.mubr.bf16.gmra.mrb[0].mxu0 %v1324
          %v1536 = vpop.f32.mrb[0].mxu0
          %v1537 = vadd.f32 0.0, %v1536
          %v1538 = vpop.f32.mrb[0].mxu0
          %v1539 = vpop.f32.mrb[0].mxu0
          %v1540 = vadd.f32 0.0, %v1539
          %v1541 = vpop.f32.mrb[0].mxu0
          %1542 = vmatprep.mubr.bf16.mxu0 0
          %1543 = vmatmul.mubr.bf16.gmra.mrb[0].mxu0 %v1325
          %v1544 = vpop.f32.mrb[0].mxu0
          %v1545 = vadd.f32 0.0, %v1544
          %v1546 = vpop.f32.mrb[0].mxu0
          %v1547 = vpop.f32.mrb[0].mxu0
          %v1548 = vadd.f32 0.0, %v1547
          %v1549 = vpop.f32.mrb[0].mxu0
          %1550 = vdwg.mxu0
          %v1551 = vld [vmem:[%s505] sm:$0xff]
          %v1552 = vld [vmem:[%s505 + $0x8] sm:$0xff]
          %v1553 = vld [vmem:[%s505 + $0x10] sm:$0xff]
          %v1554 = vld [vmem:[%s505 + $0x18] sm:$0xff]
          %v1555 = vld [vmem:[%s505 + $0x20] sm:$0xff]
          %v1556 = vld [vmem:[%s505 + $0x28] sm:$0xff]
          %v1557 = vld [vmem:[%s505 + $0x30] sm:$0xff]
          %v1558 = vld [vmem:[%s505 + $0x38] sm:$0xff]
          %v1559 = vld [vmem:[%s505 + $0x40] sm:$0xff]
          %v1560 = vld [vmem:[%s505 + $0x48] sm:$0xff]
          %v1561 = vld [vmem:[%s505 + $0x50] sm:$0xff]
          %v1562 = vld [vmem:[%s505 + $0x58] sm:$0xff]
          %v1563 = vld [vmem:[%s505 + $0x60] sm:$0xff]
          %v1564 = vld [vmem:[%s505 + $0x68] sm:$0xff]
          %v1565 = vld [vmem:[%s505 + $0x70] sm:$0xff]
          %v1566 = vld [vmem:[%s505 + $0x78] sm:$0xff]
          %v1567 = vld [vmem:[%s505 + $0x80] sm:$0xff]
          %v1568 = vld [vmem:[%s505 + $0x88] sm:$0xff]
          %v1569 = vld [vmem:[%s505 + $0x90] sm:$0xff]
          %v1570 = vld [vmem:[%s505 + $0x98] sm:$0xff]
          %v1571 = vld [vmem:[%s505 + $0xa0] sm:$0xff]
          %v1572 = vld [vmem:[%s505 + $0xa8] sm:$0xff]
          %v1573 = vld [vmem:[%s505 + $0xb0] sm:$0xff]
          %v1574 = vld [vmem:[%s505 + $0xb8] sm:$0xff]
          %v1575 = vld [vmem:[%s505 + $0xc0] sm:$0xff]
          %v1576 = vld [vmem:[%s505 + $0xc8] sm:$0xff]
          %v1577 = vld [vmem:[%s505 + $0xd0] sm:$0xff]
          %v1578 = vld [vmem:[%s505 + $0xd8] sm:$0xff]
          %v1579 = vld [vmem:[%s505 + $0xe0] sm:$0xff]
          %v1580 = vld [vmem:[%s505 + $0xe8] sm:$0xff]
          %v1581 = vld [vmem:[%s505 + $0xf0] sm:$0xff]
          %v1582 = vld [vmem:[%s505 + $0xf8] sm:$0xff]
          // Predicated region
          $region53: #{tpu_custom_call.1} parent=51 // pred_check
            %p1583 = pneg %p581
          $region54: #{tpu_custom_call.1} parent=51 // pred_check_branch
            %1585 = sbr.rel (%p1583) target = $region56
          $region55: #{tpu_custom_call.1} parent=51 // pred_region
            %v1586 = vld [vmem:[#allocation2] sm:$0xff]
            %v1587 = vld [vmem:[#allocation2 + $0x8] sm:$0xff]
            %v1588 = vld [vmem:[#allocation2 + $0x10] sm:$0xff]
            %v1589 = vld [vmem:[#allocation2 + $0x18] sm:$0xff]
            %v1590 = vld [vmem:[#allocation2 + $0x20] sm:$0xff]
            %v1591 = vld [vmem:[#allocation2 + $0x28] sm:$0xff]
            %v1592 = vld [vmem:[#allocation2 + $0x30] sm:$0xff]
            %v1593 = vld [vmem:[#allocation2 + $0x38] sm:$0xff]
            %v1594 = vld [vmem:[#allocation2 + $0x40] sm:$0xff]
            %v1595 = vld [vmem:[#allocation2 + $0x48] sm:$0xff]
            %v1596 = vld [vmem:[#allocation2 + $0x50] sm:$0xff]
            %v1597 = vld [vmem:[#allocation2 + $0x58] sm:$0xff]
            %v1598 = vld [vmem:[#allocation2 + $0x60] sm:$0xff]
            %v1599 = vld [vmem:[#allocation2 + $0x68] sm:$0xff]
            %v1600 = vld [vmem:[#allocation2 + $0x70] sm:$0xff]
            %v1601 = vld [vmem:[#allocation2 + $0x78] sm:$0xff]
            %v1602 = vld [vmem:[#allocation2 + $0x80] sm:$0xff]
            %v1603 = vld [vmem:[#allocation2 + $0x88] sm:$0xff]
            %v1604 = vld [vmem:[#allocation2 + $0x90] sm:$0xff]
            %v1605 = vld [vmem:[#allocation2 + $0x98] sm:$0xff]
            %v1606 = vld [vmem:[#allocation2 + $0xa0] sm:$0xff]
            %v1607 = vld [vmem:[#allocation2 + $0xa8] sm:$0xff]
            %v1608 = vld [vmem:[#allocation2 + $0xb0] sm:$0xff]
            %v1609 = vld [vmem:[#allocation2 + $0xb8] sm:$0xff]
            %v1610 = vld [vmem:[#allocation2 + $0xc0] sm:$0xff]
            %v1611 = vld [vmem:[#allocation2 + $0xc8] sm:$0xff]
            %v1612 = vld [vmem:[#allocation2 + $0xd0] sm:$0xff]
            %v1613 = vld [vmem:[#allocation2 + $0xd8] sm:$0xff]
            %v1614 = vld [vmem:[#allocation2 + $0xe0] sm:$0xff]
            %v1615 = vld [vmem:[#allocation2 + $0xe8] sm:$0xff]
            %v1616 = vld [vmem:[#allocation2 + $0xf0] sm:$0xff]
            %v1617 = vld [vmem:[#allocation2 + $0xf8] sm:$0xff]
            %v1618 = vld [vmem:[%s574] sm:$0x1]
            %1620 = vset.pattern.permute.xlu0 0
            %1621 = vperm.xlu0 %1620, %v1551
            %v1622 = vpop.permute.xlu0 %1621
            %1625 = vset.pattern.permute.xlu0 0
            %1626 = vperm.xlu0 %1625, %v1552
            %v1627 = vpop.permute.xlu0 %1626
            %1630 = vset.pattern.permute.xlu0 0
            %1631 = vperm.xlu0 %1630, %v1553
            %v1632 = vpop.permute.xlu0 %1631
            %1635 = vset.pattern.permute.xlu0 0
            %1636 = vperm.xlu0 %1635, %v1554
            %v1637 = vpop.permute.xlu0 %1636
            %1640 = vset.pattern.permute.xlu0 0
            %1641 = vperm.xlu0 %1640, %v1555
            %v1642 = vpop.permute.xlu0 %1641
            %1645 = vset.pattern.permute.xlu0 0
            %1646 = vperm.xlu0 %1645, %v1556
            %v1647 = vpop.permute.xlu0 %1646
            %1650 = vset.pattern.permute.xlu0 0
            %1651 = vperm.xlu0 %1650, %v1557
            %v1652 = vpop.permute.xlu0 %1651
            %1655 = vset.pattern.permute.xlu0 0
            %1656 = vperm.xlu0 %1655, %v1558
            %v1657 = vpop.permute.xlu0 %1656
            %1660 = vset.pattern.permute.xlu0 0
            %1661 = vperm.xlu0 %1660, %v1559
            %v1662 = vpop.permute.xlu0 %1661
            %1665 = vset.pattern.permute.xlu0 0
            %1666 = vperm.xlu0 %1665, %v1560
            %v1667 = vpop.permute.xlu0 %1666
            %1670 = vset.pattern.permute.xlu0 0
            %1671 = vperm.xlu0 %1670, %v1561
            %v1672 = vpop.permute.xlu0 %1671
            %1675 = vset.pattern.permute.xlu0 0
            %1676 = vperm.xlu0 %1675, %v1562
            %v1677 = vpop.permute.xlu0 %1676
            %1680 = vset.pattern.permute.xlu0 0
            %1681 = vperm.xlu0 %1680, %v1563
            %v1682 = vpop.permute.xlu0 %1681
            %1685 = vset.pattern.permute.xlu0 0
            %1686 = vperm.xlu0 %1685, %v1564
            %v1687 = vpop.permute.xlu0 %1686
            %1690 = vset.pattern.permute.xlu0 0
            %1691 = vperm.xlu0 %1690, %v1565
            %v1692 = vpop.permute.xlu0 %1691
            %1695 = vset.pattern.permute.xlu0 0
            %1696 = vperm.xlu0 %1695, %v1566
            %v1697 = vpop.permute.xlu0 %1696
            %1700 = vset.pattern.permute.xlu0 0
            %1701 = vperm.xlu0 %1700, %v1567
            %v1702 = vpop.permute.xlu0 %1701
            %1705 = vset.pattern.permute.xlu0 0
            %1706 = vperm.xlu0 %1705, %v1568
            %v1707 = vpop.permute.xlu0 %1706
            %1710 = vset.pattern.permute.xlu0 0
            %1711 = vperm.xlu0 %1710, %v1569
            %v1712 = vpop.permute.xlu0 %1711
            %1715 = vset.pattern.permute.xlu0 0
            %1716 = vperm.xlu0 %1715, %v1570
            %v1717 = vpop.permute.xlu0 %1716
            %1720 = vset.pattern.permute.xlu0 0
            %1721 = vperm.xlu0 %1720, %v1571
            %v1722 = vpop.permute.xlu0 %1721
            %1725 = vset.pattern.permute.xlu0 0
            %1726 = vperm.xlu0 %1725, %v1572
            %v1727 = vpop.permute.xlu0 %1726
            %1730 = vset.pattern.permute.xlu0 0
            %1731 = vperm.xlu0 %1730, %v1573
            %v1732 = vpop.permute.xlu0 %1731
            %1735 = vset.pattern.permute.xlu0 0
            %1736 = vperm.xlu0 %1735, %v1574
            %v1737 = vpop.permute.xlu0 %1736
            %1740 = vset.pattern.permute.xlu0 0
            %1741 = vperm.xlu0 %1740, %v1575
            %v1742 = vpop.permute.xlu0 %1741
            %1745 = vset.pattern.permute.xlu0 0
            %1746 = vperm.xlu0 %1745, %v1576
            %v1747 = vpop.permute.xlu0 %1746
            %1750 = vset.pattern.permute.xlu0 0
            %1751 = vperm.xlu0 %1750, %v1577
            %v1752 = vpop.permute.xlu0 %1751
            %1755 = vset.pattern.permute.xlu0 0
            %1756 = vperm.xlu0 %1755, %v1578
            %v1757 = vpop.permute.xlu0 %1756
            %1760 = vset.pattern.permute.xlu0 0
            %1761 = vperm.xlu0 %1760, %v1579
            %v1762 = vpop.permute.xlu0 %1761
            %1765 = vset.pattern.permute.xlu0 0
            %1766 = vperm.xlu0 %1765, %v1580
            %v1767 = vpop.permute.xlu0 %1766
            %1770 = vset.pattern.permute.xlu0 0
            %1771 = vperm.xlu0 %1770, %v1581
            %v1772 = vpop.permute.xlu0 %1771
            %1775 = vset.pattern.permute.xlu0 0
            %1776 = vperm.xlu0 %1775, %v1582
            %v1777 = vpop.permute.xlu0 %1776
            %v1780 = vlaneseq
            %v1781 = vshrl.u32 %v1780, 7
            %v1782 = vsub.s32 0, %v1781
            %v1783 = vrot.slane %v1618, %v1782
            %v1785 = vmul.f32 %v1622, %v1783
            %v1786 = vmul.f32 %v1627, %v1783
            %v1787 = vmul.f32 %v1632, %v1783
            %v1788 = vmul.f32 %v1637, %v1783
            %v1789 = vmul.f32 %v1642, %v1783
            %v1790 = vmul.f32 %v1647, %v1783
            %v1791 = vmul.f32 %v1652, %v1783
            %v1792 = vmul.f32 %v1657, %v1783
            %v1793 = vmul.f32 %v1662, %v1783
            %v1794 = vmul.f32 %v1667, %v1783
            %v1795 = vmul.f32 %v1672, %v1783
            %v1796 = vmul.f32 %v1677, %v1783
            %v1797 = vmul.f32 %v1682, %v1783
            %v1798 = vmul.f32 %v1687, %v1783
            %v1799 = vmul.f32 %v1692, %v1783
            %v1800 = vmul.f32 %v1697, %v1783
            %v1801 = vmul.f32 %v1702, %v1783
            %v1802 = vmul.f32 %v1707, %v1783
            %v1803 = vmul.f32 %v1712, %v1783
            %v1804 = vmul.f32 %v1717, %v1783
            %v1805 = vmul.f32 %v1722, %v1783
            %v1806 = vmul.f32 %v1727, %v1783
            %v1807 = vmul.f32 %v1732, %v1783
            %v1808 = vmul.f32 %v1737, %v1783
            %v1809 = vmul.f32 %v1742, %v1783
            %v1810 = vmul.f32 %v1747, %v1783
            %v1811 = vmul.f32 %v1752, %v1783
            %v1812 = vmul.f32 %v1757, %v1783
            %v1813 = vmul.f32 %v1762, %v1783
            %v1814 = vmul.f32 %v1767, %v1783
            %v1815 = vmul.f32 %v1772, %v1783
            %v1816 = vmul.f32 %v1777, %v1783
            %v1817 = vadd.f32 %v1586, %v1785
            %v1818 = vadd.f32 %v1587, %v1786
            %v1819 = vadd.f32 %v1588, %v1787
            %v1820 = vadd.f32 %v1589, %v1788
            %v1821 = vadd.f32 %v1590, %v1789
            %v1822 = vadd.f32 %v1591, %v1790
            %v1823 = vadd.f32 %v1592, %v1791
            %v1824 = vadd.f32 %v1593, %v1792
            %v1825 = vadd.f32 %v1594, %v1793
            %v1826 = vadd.f32 %v1595, %v1794
            %v1827 = vadd.f32 %v1596, %v1795
            %v1828 = vadd.f32 %v1597, %v1796
            %v1829 = vadd.f32 %v1598, %v1797
            %v1830 = vadd.f32 %v1599, %v1798
            %v1831 = vadd.f32 %v1600, %v1799
            %v1832 = vadd.f32 %v1601, %v1800
            %v1833 = vadd.f32 %v1602, %v1801
            %v1834 = vadd.f32 %v1603, %v1802
            %v1835 = vadd.f32 %v1604, %v1803
            %v1836 = vadd.f32 %v1605, %v1804
            %v1837 = vadd.f32 %v1606, %v1805
            %v1838 = vadd.f32 %v1607, %v1806
            %v1839 = vadd.f32 %v1608, %v1807
            %v1840 = vadd.f32 %v1609, %v1808
            %v1841 = vadd.f32 %v1610, %v1809
            %v1842 = vadd.f32 %v1611, %v1810
            %v1843 = vadd.f32 %v1612, %v1811
            %v1844 = vadd.f32 %v1613, %v1812
            %v1845 = vadd.f32 %v1614, %v1813
            %v1846 = vadd.f32 %v1615, %v1814
            %v1847 = vadd.f32 %v1616, %v1815
            %v1848 = vadd.f32 %v1617, %v1816
            %1849 = vst [vmem:[#allocation2] sm:$0xff] %v1817
            %1850 = vst [vmem:[#allocation2 + $0x8] sm:$0xff] %v1818
            %1851 = vst [vmem:[#allocation2 + $0x10] sm:$0xff] %v1819
            %1852 = vst [vmem:[#allocation2 + $0x18] sm:$0xff] %v1820
            %1853 = vst [vmem:[#allocation2 + $0x20] sm:$0xff] %v1821
            %1854 = vst [vmem:[#allocation2 + $0x28] sm:$0xff] %v1822
            %1855 = vst [vmem:[#allocation2 + $0x30] sm:$0xff] %v1823
            %1856 = vst [vmem:[#allocation2 + $0x38] sm:$0xff] %v1824
            %1857 = vst [vmem:[#allocation2 + $0x40] sm:$0xff] %v1825
            %1858 = vst [vmem:[#allocation2 + $0x48] sm:$0xff] %v1826
            %1859 = vst [vmem:[#allocation2 + $0x50] sm:$0xff] %v1827
            %1860 = vst [vmem:[#allocation2 + $0x58] sm:$0xff] %v1828
            %1861 = vst [vmem:[#allocation2 + $0x60] sm:$0xff] %v1829
            %1862 = vst [vmem:[#allocation2 + $0x68] sm:$0xff] %v1830
            %1863 = vst [vmem:[#allocation2 + $0x70] sm:$0xff] %v1831
            %1864 = vst [vmem:[#allocation2 + $0x78] sm:$0xff] %v1832
            %1865 = vst [vmem:[#allocation2 + $0x80] sm:$0xff] %v1833
            %1866 = vst [vmem:[#allocation2 + $0x88] sm:$0xff] %v1834
            %1867 = vst [vmem:[#allocation2 + $0x90] sm:$0xff] %v1835
            %1868 = vst [vmem:[#allocation2 + $0x98] sm:$0xff] %v1836
            %1869 = vst [vmem:[#allocation2 + $0xa0] sm:$0xff] %v1837
            %1870 = vst [vmem:[#allocation2 + $0xa8] sm:$0xff] %v1838
            %1871 = vst [vmem:[#allocation2 + $0xb0] sm:$0xff] %v1839
            %1872 = vst [vmem:[#allocation2 + $0xb8] sm:$0xff] %v1840
            %1873 = vst [vmem:[#allocation2 + $0xc0] sm:$0xff] %v1841
            %1874 = vst [vmem:[#allocation2 + $0xc8] sm:$0xff] %v1842
            %1875 = vst [vmem:[#allocation2 + $0xd0] sm:$0xff] %v1843
            %1876 = vst [vmem:[#allocation2 + $0xd8] sm:$0xff] %v1844
            %1877 = vst [vmem:[#allocation2 + $0xe0] sm:$0xff] %v1845
            %1878 = vst [vmem:[#allocation2 + $0xe8] sm:$0xff] %v1846
            %1879 = vst [vmem:[#allocation2 + $0xf0] sm:$0xff] %v1847
            %1880 = vst [vmem:[#allocation2 + $0xf8] sm:$0xff] %v1848
          $region56: #{tpu_custom_call.1} parent=51 // pred_fallthru
            _
          %v1881 = vld [vmem:[#allocation2] sm:$0xff]
          %v1882 = vld [vmem:[#allocation2 + $0x8] sm:$0xff]
          %v1883 = vld [vmem:[#allocation2 + $0x10] sm:$0xff]
          %v1884 = vld [vmem:[#allocation2 + $0x18] sm:$0xff]
          %v1885 = vld [vmem:[#allocation2 + $0x20] sm:$0xff]
          %v1886 = vld [vmem:[#allocation2 + $0x28] sm:$0xff]
          %v1887 = vld [vmem:[#allocation2 + $0x30] sm:$0xff]
          %v1888 = vld [vmem:[#allocation2 + $0x38] sm:$0xff]
          %v1889 = vld [vmem:[#allocation2 + $0x40] sm:$0xff]
          %v1890 = vld [vmem:[#allocation2 + $0x48] sm:$0xff]
          %v1891 = vld [vmem:[#allocation2 + $0x50] sm:$0xff]
          %v1892 = vld [vmem:[#allocation2 + $0x58] sm:$0xff]
          %v1893 = vld [vmem:[#allocation2 + $0x60] sm:$0xff]
          %v1894 = vld [vmem:[#allocation2 + $0x68] sm:$0xff]
          %v1895 = vld [vmem:[#allocation2 + $0x70] sm:$0xff]
          %v1896 = vld [vmem:[#allocation2 + $0x78] sm:$0xff]
          %v1897 = vld [vmem:[#allocation2 + $0x80] sm:$0xff]
          %v1898 = vld [vmem:[#allocation2 + $0x88] sm:$0xff]
          %v1899 = vld [vmem:[#allocation2 + $0x90] sm:$0xff]
          %v1900 = vld [vmem:[#allocation2 + $0x98] sm:$0xff]
          %v1901 = vld [vmem:[#allocation2 + $0xa0] sm:$0xff]
          %v1902 = vld [vmem:[#allocation2 + $0xa8] sm:$0xff]
          %v1903 = vld [vmem:[#allocation2 + $0xb0] sm:$0xff]
          %v1904 = vld [vmem:[#allocation2 + $0xb8] sm:$0xff]
          %v1905 = vld [vmem:[#allocation2 + $0xc0] sm:$0xff]
          %v1906 = vld [vmem:[#allocation2 + $0xc8] sm:$0xff]
          %v1907 = vld [vmem:[#allocation2 + $0xd0] sm:$0xff]
          %v1908 = vld [vmem:[#allocation2 + $0xd8] sm:$0xff]
          %v1909 = vld [vmem:[#allocation2 + $0xe0] sm:$0xff]
          %v1910 = vld [vmem:[#allocation2 + $0xe8] sm:$0xff]
          %v1911 = vld [vmem:[#allocation2 + $0xf0] sm:$0xff]
          %v1912 = vld [vmem:[#allocation2 + $0xf8] sm:$0xff]
          %1914 = vset.pattern.permute.xlu0 0
          %1915 = vperm.xlu0 %1914, %v1551
          %v1916 = vpop.permute.xlu0 %1915
          %1919 = vset.pattern.permute.xlu0 0
          %1920 = vperm.xlu0 %1919, %v1552
          %v1921 = vpop.permute.xlu0 %1920
          %1924 = vset.pattern.permute.xlu0 0
          %1925 = vperm.xlu0 %1924, %v1553
          %v1926 = vpop.permute.xlu0 %1925
          %1929 = vset.pattern.permute.xlu0 0
          %1930 = vperm.xlu0 %1929, %v1554
          %v1931 = vpop.permute.xlu0 %1930
          %1934 = vset.pattern.permute.xlu0 0
          %1935 = vperm.xlu0 %1934, %v1555
          %v1936 = vpop.permute.xlu0 %1935
          %1939 = vset.pattern.permute.xlu0 0
          %1940 = vperm.xlu0 %1939, %v1556
          %v1941 = vpop.permute.xlu0 %1940
          %1944 = vset.pattern.permute.xlu0 0
          %1945 = vperm.xlu0 %1944, %v1557
          %v1946 = vpop.permute.xlu0 %1945
          %1949 = vset.pattern.permute.xlu0 0
          %1950 = vperm.xlu0 %1949, %v1558
          %v1951 = vpop.permute.xlu0 %1950
          %1954 = vset.pattern.permute.xlu0 0
          %1955 = vperm.xlu0 %1954, %v1559
          %v1956 = vpop.permute.xlu0 %1955
          %1959 = vset.pattern.permute.xlu0 0
          %1960 = vperm.xlu0 %1959, %v1560
          %v1961 = vpop.permute.xlu0 %1960
          %1964 = vset.pattern.permute.xlu0 0
          %1965 = vperm.xlu0 %1964, %v1561
          %v1966 = vpop.permute.xlu0 %1965
          %1969 = vset.pattern.permute.xlu0 0
          %1970 = vperm.xlu0 %1969, %v1562
          %v1971 = vpop.permute.xlu0 %1970
          %1974 = vset.pattern.permute.xlu0 0
          %1975 = vperm.xlu0 %1974, %v1563
          %v1976 = vpop.permute.xlu0 %1975
          %1979 = vset.pattern.permute.xlu0 0
          %1980 = vperm.xlu0 %1979, %v1564
          %v1981 = vpop.permute.xlu0 %1980
          %1984 = vset.pattern.permute.xlu0 0
          %1985 = vperm.xlu0 %1984, %v1565
          %v1986 = vpop.permute.xlu0 %1985
          %1989 = vset.pattern.permute.xlu0 0
          %1990 = vperm.xlu0 %1989, %v1566
          %v1991 = vpop.permute.xlu0 %1990
          %1994 = vset.pattern.permute.xlu0 0
          %1995 = vperm.xlu0 %1994, %v1567
          %v1996 = vpop.permute.xlu0 %1995
          %1999 = vset.pattern.permute.xlu0 0
          %2000 = vperm.xlu0 %1999, %v1568
          %v2001 = vpop.permute.xlu0 %2000
          %2004 = vset.pattern.permute.xlu0 0
          %2005 = vperm.xlu0 %2004, %v1569
          %v2006 = vpop.permute.xlu0 %2005
          %2009 = vset.pattern.permute.xlu0 0
          %2010 = vperm.xlu0 %2009, %v1570
          %v2011 = vpop.permute.xlu0 %2010
          %2014 = vset.pattern.permute.xlu0 0
          %2015 = vperm.xlu0 %2014, %v1571
          %v2016 = vpop.permute.xlu0 %2015
          %2019 = vset.pattern.permute.xlu0 0
          %2020 = vperm.xlu0 %2019, %v1572
          %v2021 = vpop.permute.xlu0 %2020
          %2024 = vset.pattern.permute.xlu0 0
          %2025 = vperm.xlu0 %2024, %v1573
          %v2026 = vpop.permute.xlu0 %2025
          %2029 = vset.pattern.permute.xlu0 0
          %2030 = vperm.xlu0 %2029, %v1574
          %v2031 = vpop.permute.xlu0 %2030
          %2034 = vset.pattern.permute.xlu0 0
          %2035 = vperm.xlu0 %2034, %v1575
          %v2036 = vpop.permute.xlu0 %2035
          %2039 = vset.pattern.permute.xlu0 0
          %2040 = vperm.xlu0 %2039, %v1576
          %v2041 = vpop.permute.xlu0 %2040
          %2044 = vset.pattern.permute.xlu0 0
          %2045 = vperm.xlu0 %2044, %v1577
          %v2046 = vpop.permute.xlu0 %2045
          %2049 = vset.pattern.permute.xlu0 0
          %2050 = vperm.xlu0 %2049, %v1578
          %v2051 = vpop.permute.xlu0 %2050
          %2054 = vset.pattern.permute.xlu0 0
          %2055 = vperm.xlu0 %2054, %v1579
          %v2056 = vpop.permute.xlu0 %2055
          %2059 = vset.pattern.permute.xlu0 0
          %2060 = vperm.xlu0 %2059, %v1580
          %v2061 = vpop.permute.xlu0 %2060
          %2064 = vset.pattern.permute.xlu0 0
          %2065 = vperm.xlu0 %2064, %v1581
          %v2066 = vpop.permute.xlu0 %2065
          %2069 = vset.pattern.permute.xlu0 0
          %2070 = vperm.xlu0 %2069, %v1582
          %v2071 = vpop.permute.xlu0 %2070
          %v2073 = vmul.f32 %v1916, %v1425
          %v2074 = vmul.f32 %v1921, %v1428
          %v2075 = vmul.f32 %v1926, %v1433
          %v2076 = vmul.f32 %v1931, %v1436
          %v2077 = vmul.f32 %v1936, %v1441
          %v2078 = vmul.f32 %v1941, %v1444
          %v2079 = vmul.f32 %v1946, %v1449
          %v2080 = vmul.f32 %v1951, %v1452
          %v2081 = vmul.f32 %v1956, %v1457
          %v2082 = vmul.f32 %v1961, %v1460
          %v2083 = vmul.f32 %v1966, %v1465
          %v2084 = vmul.f32 %v1971, %v1468
          %v2085 = vmul.f32 %v1976, %v1473
          %v2086 = vmul.f32 %v1981, %v1476
          %v2087 = vmul.f32 %v1986, %v1481
          %v2088 = vmul.f32 %v1991, %v1484
          %v2089 = vmul.f32 %v1996, %v1489
          %v2090 = vmul.f32 %v2001, %v1492
          %v2091 = vmul.f32 %v2006, %v1497
          %v2092 = vmul.f32 %v2011, %v1500
          %v2093 = vmul.f32 %v2016, %v1505
          %v2094 = vmul.f32 %v2021, %v1508
          %v2095 = vmul.f32 %v2026, %v1513
          %v2096 = vmul.f32 %v2031, %v1516
          %v2097 = vmul.f32 %v2036, %v1521
          %v2098 = vmul.f32 %v2041, %v1524
          %v2099 = vmul.f32 %v2046, %v1529
          %v2100 = vmul.f32 %v2051, %v1532
          %v2101 = vmul.f32 %v2056, %v1537
          %v2102 = vmul.f32 %v2061, %v1540
          %v2103 = vmul.f32 %v2066, %v1545
          %v2104 = vmul.f32 %v2071, %v1548
          %v2105 = vadd.f32 %v1881, %v2073
          %v2106 = vadd.f32 %v1882, %v2074
          %v2107 = vadd.f32 %v1883, %v2075
          %v2108 = vadd.f32 %v1884, %v2076
          %v2109 = vadd.f32 %v1885, %v2077
          %v2110 = vadd.f32 %v1886, %v2078
          %v2111 = vadd.f32 %v1887, %v2079
          %v2112 = vadd.f32 %v1888, %v2080
          %v2113 = vadd.f32 %v1889, %v2081
          %v2114 = vadd.f32 %v1890, %v2082
          %v2115 = vadd.f32 %v1891, %v2083
          %v2116 = vadd.f32 %v1892, %v2084
          %v2117 = vadd.f32 %v1893, %v2085
          %v2118 = vadd.f32 %v1894, %v2086
          %v2119 = vadd.f32 %v1895, %v2087
          %v2120 = vadd.f32 %v1896, %v2088
          %v2121 = vadd.f32 %v1897, %v2089
          %v2122 = vadd.f32 %v1898, %v2090
          %v2123 = vadd.f32 %v1899, %v2091
          %v2124 = vadd.f32 %v1900, %v2092
          %v2125 = vadd.f32 %v1901, %v2093
          %v2126 = vadd.f32 %v1902, %v2094
          %v2127 = vadd.f32 %v1903, %v2095
          %v2128 = vadd.f32 %v1904, %v2096
          %v2129 = vadd.f32 %v1905, %v2097
          %v2130 = vadd.f32 %v1906, %v2098
          %v2131 = vadd.f32 %v1907, %v2099
          %v2132 = vadd.f32 %v1908, %v2100
          %v2133 = vadd.f32 %v1909, %v2101
          %v2134 = vadd.f32 %v1910, %v2102
          %v2135 = vadd.f32 %v1911, %v2103
          %v2136 = vadd.f32 %v1912, %v2104
          %2137 = vst [vmem:[#allocation2] sm:$0xff] %v2105
          %2138 = vst [vmem:[#allocation2 + $0x8] sm:$0xff] %v2106
          %2139 = vst [vmem:[#allocation2 + $0x10] sm:$0xff] %v2107
          %2140 = vst [vmem:[#allocation2 + $0x18] sm:$0xff] %v2108
          %2141 = vst [vmem:[#allocation2 + $0x20] sm:$0xff] %v2109
          %2142 = vst [vmem:[#allocation2 + $0x28] sm:$0xff] %v2110
          %2143 = vst [vmem:[#allocation2 + $0x30] sm:$0xff] %v2111
          %2144 = vst [vmem:[#allocation2 + $0x38] sm:$0xff] %v2112
          %2145 = vst [vmem:[#allocation2 + $0x40] sm:$0xff] %v2113
          %2146 = vst [vmem:[#allocation2 + $0x48] sm:$0xff] %v2114
          %2147 = vst [vmem:[#allocation2 + $0x50] sm:$0xff] %v2115
          %2148 = vst [vmem:[#allocation2 + $0x58] sm:$0xff] %v2116
          %2149 = vst [vmem:[#allocation2 + $0x60] sm:$0xff] %v2117
          %2150 = vst [vmem:[#allocation2 + $0x68] sm:$0xff] %v2118
          %2151 = vst [vmem:[#allocation2 + $0x70] sm:$0xff] %v2119
          %2152 = vst [vmem:[#allocation2 + $0x78] sm:$0xff] %v2120
          %2153 = vst [vmem:[#allocation2 + $0x80] sm:$0xff] %v2121
          %2154 = vst [vmem:[#allocation2 + $0x88] sm:$0xff] %v2122
          %2155 = vst [vmem:[#allocation2 + $0x90] sm:$0xff] %v2123
          %2156 = vst [vmem:[#allocation2 + $0x98] sm:$0xff] %v2124
          %2157 = vst [vmem:[#allocation2 + $0xa0] sm:$0xff] %v2125
          %2158 = vst [vmem:[#allocation2 + $0xa8] sm:$0xff] %v2126
          %2159 = vst [vmem:[#allocation2 + $0xb0] sm:$0xff] %v2127
          %2160 = vst [vmem:[#allocation2 + $0xb8] sm:$0xff] %v2128
          %2161 = vst [vmem:[#allocation2 + $0xc0] sm:$0xff] %v2129
          %2162 = vst [vmem:[#allocation2 + $0xc8] sm:$0xff] %v2130
          %2163 = vst [vmem:[#allocation2 + $0xd0] sm:$0xff] %v2131
          %2164 = vst [vmem:[#allocation2 + $0xd8] sm:$0xff] %v2132
          %2165 = vst [vmem:[#allocation2 + $0xe0] sm:$0xff] %v2133
          %2166 = vst [vmem:[#allocation2 + $0xe8] sm:$0xff] %v2134
          %2167 = vst [vmem:[#allocation2 + $0xf0] sm:$0xff] %v2135
          %2168 = vst [vmem:[#allocation2 + $0xf8] sm:$0xff] %v2136
        $region52: #{tpu_custom_call.1} parent=43 // pred_fallthru
          _
        %p2169 = scmp.eq.s32.totalorder %s36, 3
        %p2170 = pnand %p2169, %p581
        %p2171 = pneg %p2170
        // Predicated region
        $region57: #{tpu_custom_call.1} parent=43 // pred_check
          _
        $region58: #{tpu_custom_call.1} parent=43 // pred_check_branch
          %2173 = sbr.rel (%p2170) target = $region60
        $region59: #{tpu_custom_call.1} parent=43 // pred_region
          %v2174 = vld [vmem:[#allocation2] sm:$0xff]
          %v2175 = vld [vmem:[#allocation2 + $0x8] sm:$0xff]
          %v2176 = vld [vmem:[#allocation2 + $0x10] sm:$0xff]
          %v2177 = vld [vmem:[#allocation2 + $0x18] sm:$0xff]
          %v2178 = vld [vmem:[#allocation2 + $0x20] sm:$0xff]
          %v2179 = vld [vmem:[#allocation2 + $0x28] sm:$0xff]
          %v2180 = vld [vmem:[#allocation2 + $0x30] sm:$0xff]
          %v2181 = vld [vmem:[#allocation2 + $0x38] sm:$0xff]
          %v2182 = vld [vmem:[#allocation2 + $0x40] sm:$0xff]
          %v2183 = vld [vmem:[#allocation2 + $0x48] sm:$0xff]
          %v2184 = vld [vmem:[#allocation2 + $0x50] sm:$0xff]
          %v2185 = vld [vmem:[#allocation2 + $0x58] sm:$0xff]
          %v2186 = vld [vmem:[#allocation2 + $0x60] sm:$0xff]
          %v2187 = vld [vmem:[#allocation2 + $0x68] sm:$0xff]
          %v2188 = vld [vmem:[#allocation2 + $0x70] sm:$0xff]
          %v2189 = vld [vmem:[#allocation2 + $0x78] sm:$0xff]
          %v2190 = vld [vmem:[#allocation2 + $0x80] sm:$0xff]
          %v2191 = vld [vmem:[#allocation2 + $0x88] sm:$0xff]
          %v2192 = vld [vmem:[#allocation2 + $0x90] sm:$0xff]
          %v2193 = vld [vmem:[#allocation2 + $0x98] sm:$0xff]
          %v2194 = vld [vmem:[#allocation2 + $0xa0] sm:$0xff]
          %v2195 = vld [vmem:[#allocation2 + $0xa8] sm:$0xff]
          %v2196 = vld [vmem:[#allocation2 + $0xb0] sm:$0xff]
          %v2197 = vld [vmem:[#allocation2 + $0xb8] sm:$0xff]
          %v2198 = vld [vmem:[#allocation2 + $0xc0] sm:$0xff]
          %v2199 = vld [vmem:[#allocation2 + $0xc8] sm:$0xff]
          %v2200 = vld [vmem:[#allocation2 + $0xd0] sm:$0xff]
          %v2201 = vld [vmem:[#allocation2 + $0xd8] sm:$0xff]
          %v2202 = vld [vmem:[#allocation2 + $0xe0] sm:$0xff]
          %v2203 = vld [vmem:[#allocation2 + $0xe8] sm:$0xff]
          %v2204 = vld [vmem:[#allocation2 + $0xf0] sm:$0xff]
          %v2205 = vld [vmem:[#allocation2 + $0xf8] sm:$0xff]
          %2206 = vst [vmem:[#allocation6] sm:$0xff] %v2174
          %2207 = vst [vmem:[#allocation6 + $0x8] sm:$0xff] %v2175
          %2208 = vst [vmem:[#allocation6 + $0x10] sm:$0xff] %v2176
          %2209 = vst [vmem:[#allocation6 + $0x18] sm:$0xff] %v2177
          %2210 = vst [vmem:[#allocation6 + $0x20] sm:$0xff] %v2178
          %2211 = vst [vmem:[#allocation6 + $0x28] sm:$0xff] %v2179
          %2212 = vst [vmem:[#allocation6 + $0x30] sm:$0xff] %v2180
          %2213 = vst [vmem:[#allocation6 + $0x38] sm:$0xff] %v2181
          %2214 = vst [vmem:[#allocation6 + $0x40] sm:$0xff] %v2182
          %2215 = vst [vmem:[#allocation6 + $0x48] sm:$0xff] %v2183
          %2216 = vst [vmem:[#allocation6 + $0x50] sm:$0xff] %v2184
          %2217 = vst [vmem:[#allocation6 + $0x58] sm:$0xff] %v2185
          %2218 = vst [vmem:[#allocation6 + $0x60] sm:$0xff] %v2186
          %2219 = vst [vmem:[#allocation6 + $0x68] sm:$0xff] %v2187
          %2220 = vst [vmem:[#allocation6 + $0x70] sm:$0xff] %v2188
          %2221 = vst [vmem:[#allocation6 + $0x78] sm:$0xff] %v2189
          %2222 = vst [vmem:[#allocation6 + $0x80] sm:$0xff] %v2190
          %2223 = vst [vmem:[#allocation6 + $0x88] sm:$0xff] %v2191
          %2224 = vst [vmem:[#allocation6 + $0x90] sm:$0xff] %v2192
          %2225 = vst [vmem:[#allocation6 + $0x98] sm:$0xff] %v2193
          %2226 = vst [vmem:[#allocation6 + $0xa0] sm:$0xff] %v2194
          %2227 = vst [vmem:[#allocation6 + $0xa8] sm:$0xff] %v2195
          %2228 = vst [vmem:[#allocation6 + $0xb0] sm:$0xff] %v2196
          %2229 = vst [vmem:[#allocation6 + $0xb8] sm:$0xff] %v2197
          %2230 = vst [vmem:[#allocation6 + $0xc0] sm:$0xff] %v2198
          %2231 = vst [vmem:[#allocation6 + $0xc8] sm:$0xff] %v2199
          %2232 = vst [vmem:[#allocation6 + $0xd0] sm:$0xff] %v2200
          %2233 = vst [vmem:[#allocation6 + $0xd8] sm:$0xff] %v2201
          %2234 = vst [vmem:[#allocation6 + $0xe0] sm:$0xff] %v2202
          %2235 = vst [vmem:[#allocation6 + $0xe8] sm:$0xff] %v2203
          %2236 = vst [vmem:[#allocation6 + $0xf0] sm:$0xff] %v2204
          %2237 = vst [vmem:[#allocation6 + $0xf8] sm:$0xff] %v2205
        $region60: #{tpu_custom_call.1} parent=43 // pred_fallthru
          _
        // Predicated region
        $region61: #{tpu_custom_call.1} parent=43 // pred_check
          %p2238 = pneg %p273
        $region62: #{tpu_custom_call.1} parent=43 // pred_check_branch
          %2240 = sbr.rel (%p2238) target = $region64
        $region63: #{tpu_custom_call.1} parent=43 // pred_region
          %s2241 = smul.u32 32, %s35
          %s2243 = ssub.s32 4096, 4096
          %2244 = vsyncadd [#allocation7], %s2243
          %s2245 = smul.addr %s2241, 128
          %s2246 = scalar_lea.hbm %s8, %s2245
          %s2247 = sshll.u32 [#allocation6], 4
          %s2248 = int_to_ptr.vmem [resolvable:$true] %s2247
          %2253 = dma.vmem_to_hbm [thread:$0]  %s2248, 4096, %s2246, [#allocation7], 128, 128, 8
        $region64: #{tpu_custom_call.1} parent=43 // pred_fallthru
          _
        // Predicated region
        $region65: #{tpu_custom_call.1} parent=43 // pred_check
          %p2254 = pneg %p273
        $region66: #{tpu_custom_call.1} parent=43 // pred_check_branch
          %2256 = sbr.rel (%p2254) target = $region68
        $region67: #{tpu_custom_call.1} parent=43 // pred_region
          %2257 = dma.done [#allocation7], 4096
        $region68: #{tpu_custom_call.1} parent=43 // pred_fallthru
          _
      $region44: #{tpu_custom_call.1} parent=5 // pred_fallthru
        _
      %p2258 = scmp.le.s32.totalorder 2, %s25
      // Predicated region
      $region69: #{tpu_custom_call.1} parent=5 // pred_check
        %p2259 = pneg %p2258
      $region70: #{tpu_custom_call.1} parent=5 // pred_check_branch
        %2261 = sbr.rel (%p2259) target = $region72
      $region71: #{tpu_custom_call.1} parent=5 // pred_region
        %s2262 = ssub.s32 %s25, 2
      $region72: #{tpu_custom_call.1} parent=5 // pred_fallthru
        _
    $region6: #{tpu_custom_call.1} parent=1 // loop_footer
      %s29 = sadd.s32 1, %s25
    $region7: #{tpu_custom_call.1} parent=1 // loop_footer_branch
      %24 = sbr.rel target = $region3
    $region8: #{tpu_custom_call.1} parent=1 // loop_exit
      _
    %2263 = vsyncpa [#allocation7], 1
    %s2264 = scalar_lea.sflag [#allocation7], 1
    %2265 = vsyncpa %s2264, 1

</llo_original>
